<compile_context>
chip_gen: v7x
topology: tpu7x:2x2x1
jax: 0.10.0
libtpu: 0.0.40
codegen_flags: <defaults>
</compile_context>

<pallas_src>
import jax
import jax.numpy as jnp
from jax.experimental import pallas as pl
from jax.experimental.pallas import tpu as pltpu

HID = 80          # logical hidden width (matches the PyTorch module)
HID_PAD = 128     # hidden width padded to a full lane group
SUBLANE = 8       # f32 sublane width — used to pad the tiny I/O feature dims
MAX_TILE_B = 512  # upper bound on batch rows per grid step (large-batch regime)


def _round_up(x, m):
    return ((x + m - 1) // m) * m


def dqn_kernel(x_ref, w1_ref, b1_ref, w2_ref, b2_ref, w3_ref, b3_ref, out_ref):
    hp = jax.lax.Precision.HIGHEST
    # hid1 = relu(x @ W1 + b1)      x: (tile_b, 8), W1: (8, 128)
    x = x_ref[...]
    h1 = jnp.dot(x, w1_ref[...], precision=hp,
                 preferred_element_type=jnp.float32) + b1_ref[...]
    h1 = jnp.maximum(h1, 0.0)
    # hid2 = relu(h1 @ W2 + b2)     W2: (128, 128)
    h2 = jnp.dot(h1, w2_ref[...], precision=hp,
                 preferred_element_type=jnp.float32) + b2_ref[...]
    h2 = jnp.maximum(h2, 0.0)
    # output = h2 @ W3 + b3         W3: (128, 8) — no activation (matches module)
    out_ref[...] = jnp.dot(h2, w3_ref[...], precision=hp,
                           preferred_element_type=jnp.float32) + b3_ref[...]


def _pad2(a, rows, cols):
    """Zero-pad a 2-D array up to (rows, cols)."""
    return jnp.zeros((rows, cols), a.dtype).at[: a.shape[0], : a.shape[1]].set(a)


def pad_dqn_params(params):
    """Pad weights/biases to TPU-friendly shapes ONCE (outside the per-call path).

    Zero padding is numerically inert:
      - padded W1 input rows (4..8) multiply zero-padded x features,
      - padded hidden lanes (80..128) get bias 0 -> relu(0) = 0,
      - padded W3 rows are zero so dead hidden lanes contribute nothing,
      - padded output lanes (2..8) are sliced off by the wrapper.
    """
    w1, b1, w2, b2, w3, b3 = params
    in_pad = _round_up(w1.shape[0], SUBLANE)     # 4 -> 8
    out_pad = _round_up(w3.shape[1], SUBLANE)    # 2 -> 8
    w1p = _pad2(w1, in_pad, HID_PAD)
    b1p = _pad2(b1, 1, HID_PAD)
    w2p = _pad2(w2, HID_PAD, HID_PAD)
    b2p = _pad2(b2, 1, HID_PAD)
    w3p = _pad2(w3, HID_PAD, out_pad)
    b3p = _pad2(b3, 1, out_pad)
    return (w1p, b1p, w2p, b2p, w3p, b3p)


def _choose_tile_b(batch):
    """Adaptive batch tile.

    - batch <= 128: single grid step with only sublane padding (no 16x padded
      rows for the RL batch=8 case).
    - larger batches: tiles up to MAX_TILE_B rows for HBM-roofline efficiency,
      but always >= 2 grid steps so v7x megacore keeps both TensorCores busy.
    """
    pb = _round_up(batch, SUBLANE)
    if pb <= 128:
        return pb
    half = _round_up((pb + 1) // 2, SUBLANE)
    return min(MAX_TILE_B, half)


def dqn_forward(x, padded_params, action_dim, tile_b=None):
    """Batched DQN forward on TPU via one Pallas kernel, grid over batch tiles."""
    w1p, b1p, w2p, b2p, w3p, b3p = padded_params
    batch, state_dim = x.shape
    in_pad = w1p.shape[0]    # 8
    out_pad = w3p.shape[1]   # 8

    if tile_b is None:
        tile_b = _choose_tile_b(batch)
    num_tiles = -(-batch // tile_b)           # ceil
    padded_batch = num_tiles * tile_b

    # Pad activations: batch rows -> multiple of tile_b, features 4 -> 8.
    xp = jnp.zeros((padded_batch, in_pad), jnp.float32)
    xp = xp.at[:batch, :state_dim].set(x)

    out = pl.pallas_call(
        dqn_kernel,
        out_shape=jax.ShapeDtypeStruct((padded_batch, out_pad), jnp.float32),
        grid_spec=pltpu.PrefetchScalarGridSpec(
            num_scalar_prefetch=0,
            grid=(num_tiles,),
            in_specs=[
                pl.BlockSpec((tile_b, in_pad), lambda i: (i, 0)),    # x tile
                pl.BlockSpec((in_pad, HID_PAD), lambda i: (0, 0)),   # W1 (8,128)
                pl.BlockSpec((1, HID_PAD), lambda i: (0, 0)),        # b1
                pl.BlockSpec((HID_PAD, HID_PAD), lambda i: (0, 0)),  # W2 (128,128)
                pl.BlockSpec((1, HID_PAD), lambda i: (0, 0)),        # b2
                pl.BlockSpec((HID_PAD, out_pad), lambda i: (0, 0)),  # W3 (128,8)
                pl.BlockSpec((1, out_pad), lambda i: (0, 0)),        # b3
            ],
            out_specs=pl.BlockSpec((tile_b, out_pad), lambda i: (i, 0)),
        ),
        compiler_params=pltpu.CompilerParams(
            dimension_semantics=("parallel",)  # batch tiles are independent
        ),
    )(xp, w1p, b1p, w2p, b2p, w3p, b3p)

    # Strip batch / output padding (small: out_pad is only 8 lanes).
    return out[:batch, :action_dim]


def init_dqn_params(key, state_dim, action_dim, hid=HID):
    """Deterministic init mimicking torch.nn.Linear default U[-1/sqrt(fan_in), ...].

    Weights are stored transposed relative to PyTorch: (in_features, out_features).
    """
    ks = jax.random.split(key, 6)

    def lin(kw, kb, fan_in, fan_out):
        bound = 1.0 / jnp.sqrt(jnp.float32(fan_in))
        w = jax.random.uniform(kw, (fan_in, fan_out), jnp.float32, -bound, bound)
        b = jax.random.uniform(kb, (1, fan_out), jnp.float32, -bound, bound)
        return w, b

    w1, b1 = lin(ks[0], ks[1], state_dim, hid)
    w2, b2 = lin(ks[2], ks[3], hid, hid)
    w3, b3 = lin(ks[4], ks[5], hid, action_dim)
    return (w1, b1, w2, b2, w3, b3)


def dqn_ref(x, params):
    """Pure-JAX reference (unpadded, HIGHEST precision) for correctness checking."""
    w1, b1, w2, b2, w3, b3 = params
    hp = jax.lax.Precision.HIGHEST
    h1 = jnp.maximum(jnp.dot(x, w1, precision=hp) + b1, 0.0)
    h2 = jnp.maximum(jnp.dot(h1, w2, precision=hp) + b2, 0.0)
    return jnp.dot(h2, w3, precision=hp) + b3


if __name__ == "__main__":
    # CartPole-like dims: state_dim=4, action_dim=2.
    state_dim, action_dim = 4, 2

    key = jax.random.PRNGKey(0)
    kx1, kx2, kp = jax.random.split(key, 3)

    params = init_dqn_params(kp, state_dim, action_dim)
    padded_params = pad_dqn_params(params)          # pad weights ONCE

    # Small RL-style batch: single 8-row grid step.
    batch_small = 8
    x_small = jax.random.normal(kx1, (batch_small, state_dim), dtype=jnp.float32)
    out_small = dqn_forward(x_small, padded_params, action_dim)
    jax.block_until_ready(out_small)
    ref_small = dqn_ref(x_small, params)
    assert out_small.shape == (batch_small, action_dim), out_small.shape
    assert jnp.allclose(out_small, ref_small, atol=1e-5, rtol=1e-5), "small-batch mismatch"

    # Larger batch: exercises the multi-step (grid >= 2) adaptive-tile path.
    batch_big = 300
    x_big = jax.random.normal(kx2, (batch_big, state_dim), dtype=jnp.float32)
    out_big = dqn_forward(x_big, padded_params, action_dim)
    jax.block_until_ready(out_big)
    ref_big = dqn_ref(x_big, params)
    assert out_big.shape == (batch_big, action_dim), out_big.shape
    assert jnp.allclose(out_big, ref_big, atol=1e-5, rtol=1e-5), "big-batch mismatch"

    print("KERNEL_OK")
</pallas_src>

<mosaic_0001>
module attributes {stable_mosaic.version = 11 : i64} {
  func.func @dqn_kernel(%arg0: i32, %arg1: memref<8x8xf32, #tpu.memory_space<vmem>>, %arg2: memref<8x128xf32, #tpu.memory_space<vmem>>, %arg3: memref<1x128xf32, #tpu.memory_space<vmem>>, %arg4: memref<128x128xf32, #tpu.memory_space<vmem>>, %arg5: memref<1x128xf32, #tpu.memory_space<vmem>>, %arg6: memref<128x8xf32, #tpu.memory_space<vmem>>, %arg7: memref<1x8xf32, #tpu.memory_space<vmem>>, %arg8: memref<8x8xf32, #tpu.memory_space<vmem>>) attributes {dimension_semantics = [#tpu.dimension_semantics<parallel>], iteration_bounds = array<i64: 1>, scalar_prefetch = 0 : i64, scratch_operands = 0 : i64, tpu.core_type = #tpu.core_type<tc>, window_params = [{transform_indices = @transform_0, window_bounds = array<i64: 8, 8>}, {pipeline_mode = #tpu.pipeline_mode<synchronous>, transform_indices = @transform_1, window_bounds = array<i64: 8, 128>}, {pipeline_mode = #tpu.pipeline_mode<synchronous>, transform_indices = @transform_2, window_bounds = array<i64: 1, 128>}, {pipeline_mode = #tpu.pipeline_mode<synchronous>, transform_indices = @transform_3, window_bounds = array<i64: 128, 128>}, {pipeline_mode = #tpu.pipeline_mode<synchronous>, transform_indices = @transform_4, window_bounds = array<i64: 1, 128>}, {pipeline_mode = #tpu.pipeline_mode<synchronous>, transform_indices = @transform_5, window_bounds = array<i64: 128, 8>}, {pipeline_mode = #tpu.pipeline_mode<synchronous>, transform_indices = @transform_6, window_bounds = array<i64: 1, 8>}, {transform_indices = @transform_7, window_bounds = array<i64: 8, 8>}]} {
    %c0 = arith.constant 0 : index
    %c0_0 = arith.constant 0 : index
    %0 = vector.load %arg1[%c0, %c0_0] : memref<8x8xf32, #tpu.memory_space<vmem>>, vector<8x8xf32>
    %c0_1 = arith.constant 0 : index
    %c0_2 = arith.constant 0 : index
    %1 = vector.load %arg2[%c0_1, %c0_2] : memref<8x128xf32, #tpu.memory_space<vmem>>, vector<8x128xf32>
    %cst = arith.constant dense<0.000000e+00> : vector<8x128xf32>
    %2 = tpu.matmul %0, %1, %cst {dimension_numbers = #tpu.dot_dimension_numbers<[1], [0], [0], [1], [0, 0, 1, 1], [], []>, precision = #tpu.contract_precision<fp32>} : vector<8x8xf32>, vector<8x128xf32>, vector<8x128xf32> -> vector<8x128xf32>
    %c0_3 = arith.constant 0 : index
    %c0_4 = arith.constant 0 : index
    %3 = vector.load %arg3[%c0_3, %c0_4] : memref<1x128xf32, #tpu.memory_space<vmem>>, vector<1x128xf32>
    %4 = vector.broadcast %3 : vector<1x128xf32> to vector<8x128xf32>
    %5 = arith.addf %2, %4 : vector<8x128xf32>
    %cst_5 = arith.constant 0.000000e+00 : f32
    %6 = vector.broadcast %cst_5 : f32 to vector<8x128xf32>
    %7 = arith.maximumf %5, %6 : vector<8x128xf32>
    %c0_6 = arith.constant 0 : index
    %c0_7 = arith.constant 0 : index
    %8 = vector.load %arg4[%c0_6, %c0_7] : memref<128x128xf32, #tpu.memory_space<vmem>>, vector<128x128xf32>
    %cst_8 = arith.constant dense<0.000000e+00> : vector<8x128xf32>
    %9 = tpu.matmul %7, %8, %cst_8 {dimension_numbers = #tpu.dot_dimension_numbers<[1], [0], [0], [1], [0, 0, 1, 1], [], []>, precision = #tpu.contract_precision<fp32>} : vector<8x128xf32>, vector<128x128xf32>, vector<8x128xf32> -> vector<8x128xf32>
    %c0_9 = arith.constant 0 : index
    %c0_10 = arith.constant 0 : index
    %10 = vector.load %arg5[%c0_9, %c0_10] : memref<1x128xf32, #tpu.memory_space<vmem>>, vector<1x128xf32>
    %11 = vector.broadcast %10 : vector<1x128xf32> to vector<8x128xf32>
    %12 = arith.addf %9, %11 : vector<8x128xf32>
    %cst_11 = arith.constant 0.000000e+00 : f32
    %13 = vector.broadcast %cst_11 : f32 to vector<8x128xf32>
    %14 = arith.maximumf %12, %13 : vector<8x128xf32>
    %c0_12 = arith.constant 0 : index
    %c0_13 = arith.constant 0 : index
    %15 = vector.load %arg6[%c0_12, %c0_13] : memref<128x8xf32, #tpu.memory_space<vmem>>, vector<128x8xf32>
    %cst_14 = arith.constant dense<0.000000e+00> : vector<8x8xf32>
    %16 = tpu.matmul %14, %15, %cst_14 {dimension_numbers = #tpu.dot_dimension_numbers<[1], [0], [0], [1], [0, 0, 1, 1], [], []>, precision = #tpu.contract_precision<fp32>} : vector<8x128xf32>, vector<128x8xf32>, vector<8x8xf32> -> vector<8x8xf32>
    %c0_15 = arith.constant 0 : index
    %c0_16 = arith.constant 0 : index
    %17 = vector.load %arg7[%c0_15, %c0_16] : memref<1x8xf32, #tpu.memory_space<vmem>>, vector<1x8xf32>
    %18 = vector.broadcast %17 : vector<1x8xf32> to vector<8x8xf32>
    %19 = arith.addf %16, %18 : vector<8x8xf32>
    %c0_17 = arith.constant 0 : index
    %c0_18 = arith.constant 0 : index
    %20 = vector.load %arg8[%c0_17, %c0_18] : memref<8x8xf32, #tpu.memory_space<vmem>>, vector<8x8xf32>
    tpu.vector_store %arg8[%c0_17, %c0_18], %19 {strides = array<i32>} : memref<8x8xf32, #tpu.memory_space<vmem>>, vector<8x8xf32>,
    return
  }
  func.func @transform_0(%arg0: i32) -> (i32, i32) {
    %c0_i32 = arith.constant 0 : i32
    %c0_i32_0 = arith.constant 0 : i32
    return %arg0, %c0_i32 : i32, i32
  }
  func.func @transform_1(%arg0: i32) -> (i32, i32) {
    %c0_i32 = arith.constant 0 : i32
    %c0_i32_0 = arith.constant 0 : i32
    %c0_i32_1 = arith.constant 0 : i32
    return %c0_i32, %c0_i32_0 : i32, i32
  }
  func.func @transform_2(%arg0: i32) -> (i32, i32) {
    %c0_i32 = arith.constant 0 : i32
    %c0_i32_0 = arith.constant 0 : i32
    %c0_i32_1 = arith.constant 0 : i32
    return %c0_i32, %c0_i32_0 : i32, i32
  }
  func.func @transform_3(%arg0: i32) -> (i32, i32) {
    %c0_i32 = arith.constant 0 : i32
    %c0_i32_0 = arith.constant 0 : i32
    %c0_i32_1 = arith.constant 0 : i32
    return %c0_i32, %c0_i32_0 : i32, i32
  }
  func.func @transform_4(%arg0: i32) -> (i32, i32) {
    %c0_i32 = arith.constant 0 : i32
    %c0_i32_0 = arith.constant 0 : i32
    %c0_i32_1 = arith.constant 0 : i32
    return %c0_i32, %c0_i32_0 : i32, i32
  }
  func.func @transform_5(%arg0: i32) -> (i32, i32) {
    %c0_i32 = arith.constant 0 : i32
    %c0_i32_0 = arith.constant 0 : i32
    %c0_i32_1 = arith.constant 0 : i32
    return %c0_i32, %c0_i32_0 : i32, i32
  }
  func.func @transform_6(%arg0: i32) -> (i32, i32) {
    %c0_i32 = arith.constant 0 : i32
    %c0_i32_0 = arith.constant 0 : i32
    %c0_i32_1 = arith.constant 0 : i32
    return %c0_i32, %c0_i32_0 : i32, i32
  }
  func.func @transform_7(%arg0: i32) -> (i32, i32) {
    %c0_i32 = arith.constant 0 : i32
    %c0_i32_0 = arith.constant 0 : i32
    return %arg0, %c0_i32 : i32, i32
  }
}

</mosaic_0001>

<llo_original>
// kernel: tpu_custom_call.1
$region0: #{tpu_custom_call.1}
  #allocation0 [shape = 'u32[]', space=smem, size = 0x4, offset = 0x4, fixed_abs, tag = 'smem constant byte address 0x4 - core index']
  #allocation1 [shape = 'u32[144,128]{1,0:T(1,128)}', space=vmem, size = 0x12000, scoped, tag = 'internal scratch']
  %s0 = inlined_call_operand.vmem [shape: f32[8,8], index: 0, kind: input, shape index: {}]
  %s1 = inlined_call_operand.hbm [shape: f32[8,128], index: 1, kind: input, shape index: {}]
  %s2 = inlined_call_operand.vmem [shape: f32[1,128], index: 2, kind: input, shape index: {}]
  %s3 = inlined_call_operand.vmem [shape: f32[128,128], index: 3, kind: input, shape index: {}]
  %s4 = inlined_call_operand.vmem [shape: f32[1,128], index: 4, kind: input, shape index: {}]
  %s5 = inlined_call_operand.vmem [shape: f32[128,8], index: 5, kind: input, shape index: {}]
  %s6 = inlined_call_operand.vmem [shape: f32[1,8], index: 6, kind: input, shape index: {}]
  %s7 = inlined_call_operand.hbm [shape: f32[8,8], index: 7, kind: output, shape index: {}]
  %s8 = sld [smem:[#allocation0]]
  $region42: #{tpu_custom_call.1} parent=0
    _
  %s10 = ssub.s32 1, %s8
  %s11 = scalar_select 0, %s10, %s8
  $region1: #{tpu_custom_call.1} parent=0
    #allocation2 [shape = 'u8[4096]{0}', space=vmem, size = 0x1000, scoped, tag = 'input window, operand 1, single buffered']
    #allocation3 [shape = 's32[1]{0}', space=sflag, size = 0x4, scoped, tag = 'scoped memory for tpu_custom_call.1']
    #allocation4 [shape = 's32[1]{0}', space=sflag, size = 0x4, scoped, tag = 'scoped memory for tpu_custom_call.1']
    #allocation5 [shape = 'u8[4096]{0}', space=vmem, size = 0x1000, scoped, tag = 'output window, operand 0, single buffered']
    %12 = vsyncpa [#allocation3], 0
    %13 = vsyncpa [#allocation4], 0
    // Predicated region
    $region2: #{tpu_custom_call.1} parent=1 // pred_check
      _
    $region3: #{tpu_custom_call.1} parent=1 // pred_check_branch
      %15 = sbr.rel (0) target = $region5
    $region4: #{tpu_custom_call.1} parent=1 // pred_region
      _
    $region5: #{tpu_custom_call.1} parent=1 // pred_fallthru
      _
    // Predicated region
    $region6: #{tpu_custom_call.1} parent=1 // pred_check
      _
    $region7: #{tpu_custom_call.1} parent=1 // pred_check_branch
      %17 = sbr.rel (0) target = $region9
    $region8: #{tpu_custom_call.1} parent=1 // pred_region
      %s19 = ssub.s32 128, 128
      %20 = vsyncadd [#allocation3], %s19
      %s22 = sshll.u32 [#allocation2], 4
      %s23 = int_to_ptr.vmem [resolvable:$true] %s22
      %25 = dma.hbm_to_vmem [thread:$0]  %s1, 128, %s23, [#allocation3]
    $region9: #{tpu_custom_call.1} parent=1 // pred_fallthru
      _
    // Predicated region
    $region10: #{tpu_custom_call.1} parent=1 // pred_check
      _
    $region11: #{tpu_custom_call.1} parent=1 // pred_check_branch
      %27 = sbr.rel (0) target = $region13
    $region12: #{tpu_custom_call.1} parent=1 // pred_region
      _
    $region13: #{tpu_custom_call.1} parent=1 // pred_fallthru
      _
    // Predicated region
    $region14: #{tpu_custom_call.1} parent=1 // pred_check
      _
    $region15: #{tpu_custom_call.1} parent=1 // pred_check_branch
      %29 = sbr.rel (0) target = $region17
    $region16: #{tpu_custom_call.1} parent=1 // pred_region
      _
    $region17: #{tpu_custom_call.1} parent=1 // pred_fallthru
      _
    // Predicated region
    $region18: #{tpu_custom_call.1} parent=1 // pred_check
      _
    $region19: #{tpu_custom_call.1} parent=1 // pred_check_branch
      %31 = sbr.rel (0) target = $region21
    $region20: #{tpu_custom_call.1} parent=1 // pred_region
      _
    $region21: #{tpu_custom_call.1} parent=1 // pred_fallthru
      _
    // Predicated region
    $region22: #{tpu_custom_call.1} parent=1 // pred_check
      _
    $region23: #{tpu_custom_call.1} parent=1 // pred_check_branch
      %33 = sbr.rel (0) target = $region25
    $region24: #{tpu_custom_call.1} parent=1 // pred_region
      _
    $region25: #{tpu_custom_call.1} parent=1 // pred_fallthru
      _
    // Predicated region
    $region26: #{tpu_custom_call.1} parent=1 // pred_check
      _
    $region27: #{tpu_custom_call.1} parent=1 // pred_check_branch
      %35 = sbr.rel (0) target = $region29
    $region28: #{tpu_custom_call.1} parent=1 // pred_region
      _
    $region29: #{tpu_custom_call.1} parent=1 // pred_fallthru
      _
    // Predicated region
    $region30: #{tpu_custom_call.1} parent=1 // pred_check
      _
    $region31: #{tpu_custom_call.1} parent=1 // pred_check_branch
      %37 = sbr.rel (0) target = $region33
    $region32: #{tpu_custom_call.1} parent=1 // pred_region
      %38 = dma.done [#allocation3], 128
    $region33: #{tpu_custom_call.1} parent=1 // pred_fallthru
      _
    %v39 = vld [vmem:[%s0] sm:$0xff]
    %v40 = vld [vmem:[#allocation2] sm:$0xff]
    %v41 = vld [vmem:[%s2] sm:$0x1]
    %v43 = vlaneseq
    %v44 = vshrl.u32 %v43, 7
    %v45 = vsub.s32 0, %v44
    %v46 = vrot.slane %v41, %v45
    %vm48 = vcmask 64512
    %v50 = vsel %vm48, %v39, 0
    %52 = vmatprep.subr.mxu0 0.0
    %v53 = vand.u32 %v40, 4294901760
    %54 = vmatpush1.msra.mxu0 %v53
    %55 = vmatprep.subr.mxu0 0.0
    %56 = vmatpush1.msra.mxu0 0.0
    %57 = vmatprep.subr.mxu0 0.0
    %58 = vmatpush1.msra.mxu0 0.0
    %59 = vmatprep.subr.mxu0 0.0
    %60 = vmatpush1.msra.mxu0 0.0
    %61 = vmatprep.subr.mxu0 0.0
    %62 = vmatpush1.msra.mxu0 0.0
    %63 = vmatprep.subr.mxu0 0.0
    %64 = vmatpush1.msra.mxu0 0.0
    %65 = vmatprep.subr.mxu0 0.0
    %66 = vmatpush1.msra.mxu0 0.0
    %67 = vmatprep.subr.mxu0 0.0
    %68 = vmatpush1.msra.mxu0 0.0
    %69 = vmatprep.subr.mxu0 0.0
    %70 = vmatpush1.msra.mxu0 0.0
    %71 = vmatprep.subr.mxu0 0.0
    %72 = vmatpush1.msra.mxu0 0.0
    %73 = vmatprep.subr.mxu0 0.0
    %74 = vmatpush1.msra.mxu0 0.0
    %75 = vmatprep.subr.mxu0 0.0
    %76 = vmatpush1.msra.mxu0 0.0
    %77 = vmatprep.subr.mxu0 0.0
    %78 = vmatpush1.msra.mxu0 0.0
    %79 = vmatprep.subr.mxu0 0.0
    %80 = vmatpush1.msra.mxu0 0.0
    %81 = vmatprep.subr.mxu0 0.0
    %82 = vmatpush1.msra.mxu0 0.0
    %83 = vmatprep.subr.mxu0 0.0
    %84 = vmatpush1.msra.mxu0 0.0
    %85 = vmatprep.subr.mxu0 0.0
    %86 = vmatpush1.msra.mxu0 0.0
    %87 = vmatprep.subr.mxu0 0.0
    %88 = vmatpush1.msra.mxu0 0.0
    %89 = vmatprep.subr.mxu0 0.0
    %90 = vmatpush1.msra.mxu0 0.0
    %91 = vmatprep.subr.mxu0 0.0
    %92 = vmatpush1.msra.mxu0 0.0
    %93 = vmatprep.subr.mxu0 0.0
    %94 = vmatpush1.msra.mxu0 0.0
    %95 = vmatprep.subr.mxu0 0.0
    %96 = vmatpush1.msra.mxu0 0.0
    %97 = vmatprep.subr.mxu0 0.0
    %98 = vmatpush1.msra.mxu0 0.0
    %99 = vmatprep.subr.mxu0 0.0
    %100 = vmatpush1.msra.mxu0 0.0
    %101 = vmatprep.subr.mxu0 0.0
    %102 = vmatpush1.msra.mxu0 0.0
    %103 = vmatprep.subr.mxu0 0.0
    %104 = vmatpush1.msra.mxu0 0.0
    %105 = vmatprep.subr.mxu0 0.0
    %106 = vmatpush1.msra.mxu0 0.0
    %107 = vmatprep.subr.mxu0 0.0
    %108 = vmatpush1.msra.mxu0 0.0
    %109 = vmatprep.subr.mxu0 0.0
    %110 = vmatpush1.msra.mxu0 0.0
    %111 = vmatprep.subr.mxu0 0.0
    %112 = vmatpush1.msra.mxu0 0.0
    %113 = vmatprep.subr.mxu0 0.0
    %114 = vmatpush1.msra.mxu0 0.0
    %115 = vmatprep.subr.mxu0 0.0
    %116 = vmatpush1.msra.mxu0 0.0
    %117 = vmatprep.mubr.f32.mxu0 0.0
    %v118 = vand.u32 %v50, 4294901760
    %v119 = vsub.f32 %v50, %v118
    %v120 = vand.u32 %v119, 4294901760
    %v121 = vsub.f32 %v119, %v120
    %v122 = vand.u32 %v121, 4294901760
    %123 = vmatmul.mubr.f32.gmra.mrb[0].mxu0 %v122
    %v124 = vpop.f32.mrb[0].mxu0
    %v125 = vadd.f32 %v46, %v124
    %v126 = vpop.f32.mrb[0].mxu0
    %127 = vdwg.mxu0
    %128 = vmatprep.subr.mxu0 0.0
    %v129 = vand.u32 %v40, 4294901760
    %v130 = vsub.f32 %v40, %v129
    %v131 = vand.u32 %v130, 4294901760
    %v132 = vsub.f32 %v130, %v131
    %v133 = vand.u32 %v132, 4294901760
    %134 = vmatpush1.msra.mxu0 %v133
    %135 = vmatprep.subr.mxu0 0.0
    %136 = vmatpush1.msra.mxu0 0.0
    %137 = vmatprep.subr.mxu0 0.0
    %138 = vmatpush1.msra.mxu0 0.0
    %139 = vmatprep.subr.mxu0 0.0
    %140 = vmatpush1.msra.mxu0 0.0
    %141 = vmatprep.subr.mxu0 0.0
    %142 = vmatpush1.msra.mxu0 0.0
    %143 = vmatprep.subr.mxu0 0.0
    %144 = vmatpush1.msra.mxu0 0.0
    %145 = vmatprep.subr.mxu0 0.0
    %146 = vmatpush1.msra.mxu0 0.0
    %147 = vmatprep.subr.mxu0 0.0
    %148 = vmatpush1.msra.mxu0 0.0
    %149 = vmatprep.subr.mxu0 0.0
    %150 = vmatpush1.msra.mxu0 0.0
    %151 = vmatprep.subr.mxu0 0.0
    %152 = vmatpush1.msra.mxu0 0.0
    %153 = vmatprep.subr.mxu0 0.0
    %154 = vmatpush1.msra.mxu0 0.0
    %155 = vmatprep.subr.mxu0 0.0
    %156 = vmatpush1.msra.mxu0 0.0
    %157 = vmatprep.subr.mxu0 0.0
    %158 = vmatpush1.msra.mxu0 0.0
    %159 = vmatprep.subr.mxu0 0.0
    %160 = vmatpush1.msra.mxu0 0.0
    %161 = vmatprep.subr.mxu0 0.0
    %162 = vmatpush1.msra.mxu0 0.0
    %163 = vmatprep.subr.mxu0 0.0
    %164 = vmatpush1.msra.mxu0 0.0
    %165 = vmatprep.subr.mxu0 0.0
    %166 = vmatpush1.msra.mxu0 0.0
    %167 = vmatprep.subr.mxu0 0.0
    %168 = vmatpush1.msra.mxu0 0.0
    %169 = vmatprep.subr.mxu0 0.0
    %170 = vmatpush1.msra.mxu0 0.0
    %171 = vmatprep.subr.mxu0 0.0
    %172 = vmatpush1.msra.mxu0 0.0
    %173 = vmatprep.subr.mxu0 0.0
    %174 = vmatpush1.msra.mxu0 0.0
    %175 = vmatprep.subr.mxu0 0.0
    %176 = vmatpush1.msra.mxu0 0.0
    %177 = vmatprep.subr.mxu0 0.0
    %178 = vmatpush1.msra.mxu0 0.0
    %179 = vmatprep.subr.mxu0 0.0
    %180 = vmatpush1.msra.mxu0 0.0
    %181 = vmatprep.subr.mxu0 0.0
    %182 = vmatpush1.msra.mxu0 0.0
    %183 = vmatprep.subr.mxu0 0.0
    %184 = vmatpush1.msra.mxu0 0.0
    %185 = vmatprep.subr.mxu0 0.0
    %186 = vmatpush1.msra.mxu0 0.0
    %187 = vmatprep.subr.mxu0 0.0
    %188 = vmatpush1.msra.mxu0 0.0
    %189 = vmatprep.subr.mxu0 0.0
    %190 = vmatpush1.msra.mxu0 0.0
    %191 = vmatprep.subr.mxu0 0.0
    %192 = vmatpush1.msra.mxu0 0.0
    %193 = vmatprep.subr.mxu0 0.0
    %194 = vmatpush1.msra.mxu0 0.0
    %195 = vmatprep.subr.mxu0 0.0
    %196 = vmatpush1.msra.mxu0 0.0
    %197 = vmatprep.mubr.f32.mxu0 0.0
    %v198 = vand.u32 %v50, 4294901760
    %199 = vmatmul.mubr.f32.gmra.mrb[0].mxu0 %v198
    %v200 = vpop.f32.mrb[0].mxu0
    %v201 = vadd.f32 %v125, %v200
    %v202 = vpop.f32.mrb[0].mxu0
    %203 = vdwg.mxu0
    %204 = vmatprep.subr.mxu0 0.0
    %v205 = vand.u32 %v40, 4294901760
    %v206 = vsub.f32 %v40, %v205
    %207 = vmatpush1.msra.mxu0 %v206
    %208 = vmatprep.subr.mxu0 0.0
    %209 = vmatpush1.msra.mxu0 0.0
    %210 = vmatprep.subr.mxu0 0.0
    %211 = vmatpush1.msra.mxu0 0.0
    %212 = vmatprep.subr.mxu0 0.0
    %213 = vmatpush1.msra.mxu0 0.0
    %214 = vmatprep.subr.mxu0 0.0
    %215 = vmatpush1.msra.mxu0 0.0
    %216 = vmatprep.subr.mxu0 0.0
    %217 = vmatpush1.msra.mxu0 0.0
    %218 = vmatprep.subr.mxu0 0.0
    %219 = vmatpush1.msra.mxu0 0.0
    %220 = vmatprep.subr.mxu0 0.0
    %221 = vmatpush1.msra.mxu0 0.0
    %222 = vmatprep.subr.mxu0 0.0
    %223 = vmatpush1.msra.mxu0 0.0
    %224 = vmatprep.subr.mxu0 0.0
    %225 = vmatpush1.msra.mxu0 0.0
    %226 = vmatprep.subr.mxu0 0.0
    %227 = vmatpush1.msra.mxu0 0.0
    %228 = vmatprep.subr.mxu0 0.0
    %229 = vmatpush1.msra.mxu0 0.0
    %230 = vmatprep.subr.mxu0 0.0
    %231 = vmatpush1.msra.mxu0 0.0
    %232 = vmatprep.subr.mxu0 0.0
    %233 = vmatpush1.msra.mxu0 0.0
    %234 = vmatprep.subr.mxu0 0.0
    %235 = vmatpush1.msra.mxu0 0.0
    %236 = vmatprep.subr.mxu0 0.0
    %237 = vmatpush1.msra.mxu0 0.0
    %238 = vmatprep.subr.mxu0 0.0
    %239 = vmatpush1.msra.mxu0 0.0
    %240 = vmatprep.subr.mxu0 0.0
    %241 = vmatpush1.msra.mxu0 0.0
    %242 = vmatprep.subr.mxu0 0.0
    %243 = vmatpush1.msra.mxu0 0.0
    %244 = vmatprep.subr.mxu0 0.0
    %245 = vmatpush1.msra.mxu0 0.0
    %246 = vmatprep.subr.mxu0 0.0
    %247 = vmatpush1.msra.mxu0 0.0
    %248 = vmatprep.subr.mxu0 0.0
    %249 = vmatpush1.msra.mxu0 0.0
    %250 = vmatprep.subr.mxu0 0.0
    %251 = vmatpush1.msra.mxu0 0.0
    %252 = vmatprep.subr.mxu0 0.0
    %253 = vmatpush1.msra.mxu0 0.0
    %254 = vmatprep.subr.mxu0 0.0
    %255 = vmatpush1.msra.mxu0 0.0
    %256 = vmatprep.subr.mxu0 0.0
    %257 = vmatpush1.msra.mxu0 0.0
    %258 = vmatprep.subr.mxu0 0.0
    %259 = vmatpush1.msra.mxu0 0.0
    %260 = vmatprep.subr.mxu0 0.0
    %261 = vmatpush1.msra.mxu0 0.0
    %262 = vmatprep.subr.mxu0 0.0
    %263 = vmatpush1.msra.mxu0 0.0
    %264 = vmatprep.subr.mxu0 0.0
    %265 = vmatpush1.msra.mxu0 0.0
    %266 = vmatprep.subr.mxu0 0.0
    %267 = vmatpush1.msra.mxu0 0.0
    %268 = vmatprep.subr.mxu0 0.0
    %269 = vmatpush1.msra.mxu0 0.0
    %270 = vmatprep.mubr.f32.mxu0 0.0
    %v271 = vand.u32 %v50, 4294901760
    %v272 = vsub.f32 %v50, %v271
    %273 = vmatmul.mubr.f32.gmra.mrb[0].mxu0 %v272
    %v274 = vpop.f32.mrb[0].mxu0
    %v275 = vadd.f32 %v201, %v274
    %v276 = vpop.f32.mrb[0].mxu0
    %277 = vdwg.mxu0
    %278 = vmatprep.subr.mxu0 0.0
    %v279 = vand.u32 %v40, 4294901760
    %280 = vmatpush1.msra.mxu0 %v279
    %281 = vmatprep.subr.mxu0 0.0
    %282 = vmatpush1.msra.mxu0 0.0
    %283 = vmatprep.subr.mxu0 0.0
    %284 = vmatpush1.msra.mxu0 0.0
    %285 = vmatprep.subr.mxu0 0.0
    %286 = vmatpush1.msra.mxu0 0.0
    %287 = vmatprep.subr.mxu0 0.0
    %288 = vmatpush1.msra.mxu0 0.0
    %289 = vmatprep.subr.mxu0 0.0
    %290 = vmatpush1.msra.mxu0 0.0
    %291 = vmatprep.subr.mxu0 0.0
    %292 = vmatpush1.msra.mxu0 0.0
    %293 = vmatprep.subr.mxu0 0.0
    %294 = vmatpush1.msra.mxu0 0.0
    %295 = vmatprep.subr.mxu0 0.0
    %296 = vmatpush1.msra.mxu0 0.0
    %297 = vmatprep.subr.mxu0 0.0
    %298 = vmatpush1.msra.mxu0 0.0
    %299 = vmatprep.subr.mxu0 0.0
    %300 = vmatpush1.msra.mxu0 0.0
    %301 = vmatprep.subr.mxu0 0.0
    %302 = vmatpush1.msra.mxu0 0.0
    %303 = vmatprep.subr.mxu0 0.0
    %304 = vmatpush1.msra.mxu0 0.0
    %305 = vmatprep.subr.mxu0 0.0
    %306 = vmatpush1.msra.mxu0 0.0
    %307 = vmatprep.subr.mxu0 0.0
    %308 = vmatpush1.msra.mxu0 0.0
    %309 = vmatprep.subr.mxu0 0.0
    %310 = vmatpush1.msra.mxu0 0.0
    %311 = vmatprep.subr.mxu0 0.0
    %312 = vmatpush1.msra.mxu0 0.0
    %313 = vmatprep.subr.mxu0 0.0
    %314 = vmatpush1.msra.mxu0 0.0
    %315 = vmatprep.subr.mxu0 0.0
    %316 = vmatpush1.msra.mxu0 0.0
    %317 = vmatprep.subr.mxu0 0.0
    %318 = vmatpush1.msra.mxu0 0.0
    %319 = vmatprep.subr.mxu0 0.0
    %320 = vmatpush1.msra.mxu0 0.0
    %321 = vmatprep.subr.mxu0 0.0
    %322 = vmatpush1.msra.mxu0 0.0
    %323 = vmatprep.subr.mxu0 0.0
    %324 = vmatpush1.msra.mxu0 0.0
    %325 = vmatprep.subr.mxu0 0.0
    %326 = vmatpush1.msra.mxu0 0.0
    %327 = vmatprep.subr.mxu0 0.0
    %328 = vmatpush1.msra.mxu0 0.0
    %329 = vmatprep.subr.mxu0 0.0
    %330 = vmatpush1.msra.mxu0 0.0
    %331 = vmatprep.subr.mxu0 0.0
    %332 = vmatpush1.msra.mxu0 0.0
    %333 = vmatprep.subr.mxu0 0.0
    %334 = vmatpush1.msra.mxu0 0.0
    %335 = vmatprep.subr.mxu0 0.0
    %336 = vmatpush1.msra.mxu0 0.0
    %337 = vmatprep.subr.mxu0 0.0
    %338 = vmatpush1.msra.mxu0 0.0
    %339 = vmatprep.subr.mxu0 0.0
    %340 = vmatpush1.msra.mxu0 0.0
    %341 = vmatprep.subr.mxu0 0.0
    %342 = vmatpush1.msra.mxu0 0.0
    %343 = vmatprep.mubr.f32.mxu0 0.0
    %v344 = vand.u32 %v50, 4294901760
    %v345 = vsub.f32 %v50, %v344
    %v346 = vand.u32 %v345, 4294901760
    %347 = vmatmul.mubr.f32.gmra.mrb[0].mxu0 %v346
    %v348 = vpop.f32.mrb[0].mxu0
    %v349 = vadd.f32 %v275, %v348
    %v350 = vpop.f32.mrb[0].mxu0
    %351 = vdwg.mxu0
    %352 = vmatprep.subr.mxu0 0.0
    %v353 = vand.u32 %v40, 4294901760
    %v354 = vsub.f32 %v40, %v353
    %v355 = vand.u32 %v354, 4294901760
    %356 = vmatpush1.msra.mxu0 %v355
    %357 = vmatprep.subr.mxu0 0.0
    %358 = vmatpush1.msra.mxu0 0.0
    %359 = vmatprep.subr.mxu0 0.0
    %360 = vmatpush1.msra.mxu0 0.0
    %361 = vmatprep.subr.mxu0 0.0
    %362 = vmatpush1.msra.mxu0 0.0
    %363 = vmatprep.subr.mxu0 0.0
    %364 = vmatpush1.msra.mxu0 0.0
    %365 = vmatprep.subr.mxu0 0.0
    %366 = vmatpush1.msra.mxu0 0.0
    %367 = vmatprep.subr.mxu0 0.0
    %368 = vmatpush1.msra.mxu0 0.0
    %369 = vmatprep.subr.mxu0 0.0
    %370 = vmatpush1.msra.mxu0 0.0
    %371 = vmatprep.subr.mxu0 0.0
    %372 = vmatpush1.msra.mxu0 0.0
    %373 = vmatprep.subr.mxu0 0.0
    %374 = vmatpush1.msra.mxu0 0.0
    %375 = vmatprep.subr.mxu0 0.0
    %376 = vmatpush1.msra.mxu0 0.0
    %377 = vmatprep.subr.mxu0 0.0
    %378 = vmatpush1.msra.mxu0 0.0
    %379 = vmatprep.subr.mxu0 0.0
    %380 = vmatpush1.msra.mxu0 0.0
    %381 = vmatprep.subr.mxu0 0.0
    %382 = vmatpush1.msra.mxu0 0.0
    %383 = vmatprep.subr.mxu0 0.0
    %384 = vmatpush1.msra.mxu0 0.0
    %385 = vmatprep.subr.mxu0 0.0
    %386 = vmatpush1.msra.mxu0 0.0
    %387 = vmatprep.subr.mxu0 0.0
    %388 = vmatpush1.msra.mxu0 0.0
    %389 = vmatprep.subr.mxu0 0.0
    %390 = vmatpush1.msra.mxu0 0.0
    %391 = vmatprep.subr.mxu0 0.0
    %392 = vmatpush1.msra.mxu0 0.0
    %393 = vmatprep.subr.mxu0 0.0
    %394 = vmatpush1.msra.mxu0 0.0
    %395 = vmatprep.subr.mxu0 0.0
    %396 = vmatpush1.msra.mxu0 0.0
    %397 = vmatprep.subr.mxu0 0.0
    %398 = vmatpush1.msra.mxu0 0.0
    %399 = vmatprep.subr.mxu0 0.0
    %400 = vmatpush1.msra.mxu0 0.0
    %401 = vmatprep.subr.mxu0 0.0
    %402 = vmatpush1.msra.mxu0 0.0
    %403 = vmatprep.subr.mxu0 0.0
    %404 = vmatpush1.msra.mxu0 0.0
    %405 = vmatprep.subr.mxu0 0.0
    %406 = vmatpush1.msra.mxu0 0.0
    %407 = vmatprep.subr.mxu0 0.0
    %408 = vmatpush1.msra.mxu0 0.0
    %409 = vmatprep.subr.mxu0 0.0
    %410 = vmatpush1.msra.mxu0 0.0
    %411 = vmatprep.subr.mxu0 0.0
    %412 = vmatpush1.msra.mxu0 0.0
    %413 = vmatprep.subr.mxu0 0.0
    %414 = vmatpush1.msra.mxu0 0.0
    %415 = vmatprep.subr.mxu0 0.0
    %416 = vmatpush1.msra.mxu0 0.0
    %417 = vmatprep.subr.mxu0 0.0
    %418 = vmatpush1.msra.mxu0 0.0
    %419 = vmatprep.mubr.f32.mxu0 0.0
    %v420 = vand.u32 %v50, 4294901760
    %421 = vmatmul.mubr.f32.gmra.mrb[0].mxu0 %v420
    %v422 = vpop.f32.mrb[0].mxu0
    %v423 = vadd.f32 %v349, %v422
    %v424 = vpop.f32.mrb[0].mxu0
    %425 = vdwg.mxu0
    %426 = vmatprep.subr.mxu0 0.0
    %v427 = vand.u32 %v40, 4294901760
    %428 = vmatpush1.msra.mxu0 %v427
    %429 = vmatprep.subr.mxu0 0.0
    %430 = vmatpush1.msra.mxu0 0.0
    %431 = vmatprep.subr.mxu0 0.0
    %432 = vmatpush1.msra.mxu0 0.0
    %433 = vmatprep.subr.mxu0 0.0
    %434 = vmatpush1.msra.mxu0 0.0
    %435 = vmatprep.subr.mxu0 0.0
    %436 = vmatpush1.msra.mxu0 0.0
    %437 = vmatprep.subr.mxu0 0.0
    %438 = vmatpush1.msra.mxu0 0.0
    %439 = vmatprep.subr.mxu0 0.0
    %440 = vmatpush1.msra.mxu0 0.0
    %441 = vmatprep.subr.mxu0 0.0
    %442 = vmatpush1.msra.mxu0 0.0
    %443 = vmatprep.subr.mxu0 0.0
    %444 = vmatpush1.msra.mxu0 0.0
    %445 = vmatprep.subr.mxu0 0.0
    %446 = vmatpush1.msra.mxu0 0.0
    %447 = vmatprep.subr.mxu0 0.0
    %448 = vmatpush1.msra.mxu0 0.0
    %449 = vmatprep.subr.mxu0 0.0
    %450 = vmatpush1.msra.mxu0 0.0
    %451 = vmatprep.subr.mxu0 0.0
    %452 = vmatpush1.msra.mxu0 0.0
    %453 = vmatprep.subr.mxu0 0.0
    %454 = vmatpush1.msra.mxu0 0.0
    %455 = vmatprep.subr.mxu0 0.0
    %456 = vmatpush1.msra.mxu0 0.0
    %457 = vmatprep.subr.mxu0 0.0
    %458 = vmatpush1.msra.mxu0 0.0
    %459 = vmatprep.subr.mxu0 0.0
    %460 = vmatpush1.msra.mxu0 0.0
    %461 = vmatprep.subr.mxu0 0.0
    %462 = vmatpush1.msra.mxu0 0.0
    %463 = vmatprep.subr.mxu0 0.0
    %464 = vmatpush1.msra.mxu0 0.0
    %465 = vmatprep.subr.mxu0 0.0
    %466 = vmatpush1.msra.mxu0 0.0
    %467 = vmatprep.subr.mxu0 0.0
    %468 = vmatpush1.msra.mxu0 0.0
    %469 = vmatprep.subr.mxu0 0.0
    %470 = vmatpush1.msra.mxu0 0.0
    %471 = vmatprep.subr.mxu0 0.0
    %472 = vmatpush1.msra.mxu0 0.0
    %473 = vmatprep.subr.mxu0 0.0
    %474 = vmatpush1.msra.mxu0 0.0
    %475 = vmatprep.subr.mxu0 0.0
    %476 = vmatpush1.msra.mxu0 0.0
    %477 = vmatprep.subr.mxu0 0.0
    %478 = vmatpush1.msra.mxu0 0.0
    %479 = vmatprep.subr.mxu0 0.0
    %480 = vmatpush1.msra.mxu0 0.0
    %481 = vmatprep.subr.mxu0 0.0
    %482 = vmatpush1.msra.mxu0 0.0
    %483 = vmatprep.subr.mxu0 0.0
    %484 = vmatpush1.msra.mxu0 0.0
    %485 = vmatprep.subr.mxu0 0.0
    %486 = vmatpush1.msra.mxu0 0.0
    %487 = vmatprep.subr.mxu0 0.0
    %488 = vmatpush1.msra.mxu0 0.0
    %489 = vmatprep.subr.mxu0 0.0
    %490 = vmatpush1.msra.mxu0 0.0
    %491 = vmatprep.mubr.f32.mxu0 0.0
    %v492 = vand.u32 %v50, 4294901760
    %493 = vmatmul.mubr.f32.gmra.mrb[0].mxu0 %v492
    %v494 = vpop.f32.mrb[0].mxu0
    %v495 = vadd.f32 %v423, %v494
    %v496 = vpop.f32.mrb[0].mxu0
    %497 = vdwg.mxu0
    %v498 = vmax.f32 %v495, 0.0
    %v499 = vld [vmem:[%s3] sm:$0xff]
    %v500 = vld [vmem:[%s3 + $0x8] sm:$0xff]
    %v501 = vld [vmem:[%s3 + $0x10] sm:$0xff]
    %v502 = vld [vmem:[%s3 + $0x18] sm:$0xff]
    %v503 = vld [vmem:[%s3 + $0x20] sm:$0xff]
    %v504 = vld [vmem:[%s3 + $0x28] sm:$0xff]
    %v505 = vld [vmem:[%s3 + $0x30] sm:$0xff]
    %v506 = vld [vmem:[%s3 + $0x38] sm:$0xff]
    %v507 = vld [vmem:[%s3 + $0x40] sm:$0xff]
    %v508 = vld [vmem:[%s3 + $0x48] sm:$0xff]
    %v509 = vld [vmem:[%s3 + $0x50] sm:$0xff]
    %v510 = vld [vmem:[%s3 + $0x58] sm:$0xff]
    %v511 = vld [vmem:[%s3 + $0x60] sm:$0xff]
    %v512 = vld [vmem:[%s3 + $0x68] sm:$0xff]
    %v513 = vld [vmem:[%s3 + $0x70] sm:$0xff]
    %v514 = vld [vmem:[%s3 + $0x78] sm:$0xff]
    %v515 = vld [vmem:[%s4] sm:$0x1]
    %v517 = vlaneseq
    %v518 = vshrl.u32 %v517, 7
    %v519 = vsub.s32 0, %v518
    %v520 = vrot.slane %v515, %v519
    %522 = vmatprep.subr.mxu0 0.0
    %v523 = vand.u32 %v499, 4294901760
    %524 = vmatpush1.msra.mxu0 %v523
    %525 = vmatprep.subr.mxu0 0.0
    %v526 = vand.u32 %v500, 4294901760
    %527 = vmatpush1.msra.mxu0 %v526
    %528 = vmatprep.subr.mxu0 0.0
    %v529 = vand.u32 %v501, 4294901760
    %530 = vmatpush1.msra.mxu0 %v529
    %531 = vmatprep.subr.mxu0 0.0
    %v532 = vand.u32 %v502, 4294901760
    %533 = vmatpush1.msra.mxu0 %v532
    %534 = vmatprep.subr.mxu0 0.0
    %v535 = vand.u32 %v503, 4294901760
    %536 = vmatpush1.msra.mxu0 %v535
    %537 = vmatprep.subr.mxu0 0.0
    %v538 = vand.u32 %v504, 4294901760
    %539 = vmatpush1.msra.mxu0 %v538
    %540 = vmatprep.subr.mxu0 0.0
    %v541 = vand.u32 %v505, 4294901760
    %542 = vmatpush1.msra.mxu0 %v541
    %543 = vmatprep.subr.mxu0 0.0
    %v544 = vand.u32 %v506, 4294901760
    %545 = vmatpush1.msra.mxu0 %v544
    %546 = vmatprep.subr.mxu0 0.0
    %v547 = vand.u32 %v507, 4294901760
    %548 = vmatpush1.msra.mxu0 %v547
    %549 = vmatprep.subr.mxu0 0.0
    %v550 = vand.u32 %v508, 4294901760
    %551 = vmatpush1.msra.mxu0 %v550
    %552 = vmatprep.subr.mxu0 0.0
    %v553 = vand.u32 %v509, 4294901760
    %554 = vmatpush1.msra.mxu0 %v553
    %555 = vmatprep.subr.mxu0 0.0
    %v556 = vand.u32 %v510, 4294901760
    %557 = vmatpush1.msra.mxu0 %v556
    %558 = vmatprep.subr.mxu0 0.0
    %v559 = vand.u32 %v511, 4294901760
    %560 = vmatpush1.msra.mxu0 %v559
    %561 = vmatprep.subr.mxu0 0.0
    %v562 = vand.u32 %v512, 4294901760
    %563 = vmatpush1.msra.mxu0 %v562
    %564 = vmatprep.subr.mxu0 0.0
    %v565 = vand.u32 %v513, 4294901760
    %566 = vmatpush1.msra.mxu0 %v565
    %567 = vmatprep.subr.mxu0 0.0
    %v568 = vand.u32 %v514, 4294901760
    %569 = vmatpush1.msra.mxu0 %v568
    %570 = vmatprep.subr.mxu0 0.0
    %571 = vmatpush1.msra.mxu0 0.0
    %572 = vmatprep.subr.mxu0 0.0
    %573 = vmatpush1.msra.mxu0 0.0
    %574 = vmatprep.subr.mxu0 0.0
    %575 = vmatpush1.msra.mxu0 0.0
    %576 = vmatprep.subr.mxu0 0.0
    %577 = vmatpush1.msra.mxu0 0.0
    %578 = vmatprep.subr.mxu0 0.0
    %579 = vmatpush1.msra.mxu0 0.0
    %580 = vmatprep.subr.mxu0 0.0
    %581 = vmatpush1.msra.mxu0 0.0
    %582 = vmatprep.subr.mxu0 0.0
    %583 = vmatpush1.msra.mxu0 0.0
    %584 = vmatprep.subr.mxu0 0.0
    %585 = vmatpush1.msra.mxu0 0.0
    %586 = vmatprep.subr.mxu0 0.0
    %587 = vmatpush1.msra.mxu0 0.0
    %588 = vmatprep.subr.mxu0 0.0
    %589 = vmatpush1.msra.mxu0 0.0
    %590 = vmatprep.subr.mxu0 0.0
    %591 = vmatpush1.msra.mxu0 0.0
    %592 = vmatprep.subr.mxu0 0.0
    %593 = vmatpush1.msra.mxu0 0.0
    %594 = vmatprep.subr.mxu0 0.0
    %595 = vmatpush1.msra.mxu0 0.0
    %596 = vmatprep.subr.mxu0 0.0
    %597 = vmatpush1.msra.mxu0 0.0
    %598 = vmatprep.subr.mxu0 0.0
    %599 = vmatpush1.msra.mxu0 0.0
    %600 = vmatprep.subr.mxu0 0.0
    %601 = vmatpush1.msra.mxu0 0.0
    %602 = vmatprep.mubr.f32.mxu0 0.0
    %v603 = vand.u32 %v498, 4294901760
    %v604 = vsub.f32 %v498, %v603
    %v605 = vand.u32 %v604, 4294901760
    %v606 = vsub.f32 %v604, %v605
    %v607 = vand.u32 %v606, 4294901760
    %608 = vmatmul.mubr.f32.gmra.mrb[0].mxu0 %v607
    %v609 = vpop.f32.mrb[0].mxu0
    %v610 = vadd.f32 %v520, %v609
    %v611 = vpop.f32.mrb[0].mxu0
    %612 = vdwg.mxu0
    %613 = vmatprep.subr.mxu0 0.0
    %v614 = vand.u32 %v499, 4294901760
    %v615 = vsub.f32 %v499, %v614
    %v616 = vand.u32 %v615, 4294901760
    %v617 = vsub.f32 %v615, %v616
    %v618 = vand.u32 %v617, 4294901760
    %619 = vmatpush1.msra.mxu0 %v618
    %620 = vmatprep.subr.mxu0 0.0
    %v621 = vand.u32 %v500, 4294901760
    %v622 = vsub.f32 %v500, %v621
    %v623 = vand.u32 %v622, 4294901760
    %v624 = vsub.f32 %v622, %v623
    %v625 = vand.u32 %v624, 4294901760
    %626 = vmatpush1.msra.mxu0 %v625
    %627 = vmatprep.subr.mxu0 0.0
    %v628 = vand.u32 %v501, 4294901760
    %v629 = vsub.f32 %v501, %v628
    %v630 = vand.u32 %v629, 4294901760
    %v631 = vsub.f32 %v629, %v630
    %v632 = vand.u32 %v631, 4294901760
    %633 = vmatpush1.msra.mxu0 %v632
    %634 = vmatprep.subr.mxu0 0.0
    %v635 = vand.u32 %v502, 4294901760
    %v636 = vsub.f32 %v502, %v635
    %v637 = vand.u32 %v636, 4294901760
    %v638 = vsub.f32 %v636, %v637
    %v639 = vand.u32 %v638, 4294901760
    %640 = vmatpush1.msra.mxu0 %v639
    %641 = vmatprep.subr.mxu0 0.0
    %v642 = vand.u32 %v503, 4294901760
    %v643 = vsub.f32 %v503, %v642
    %v644 = vand.u32 %v643, 4294901760
    %v645 = vsub.f32 %v643, %v644
    %v646 = vand.u32 %v645, 4294901760
    %647 = vmatpush1.msra.mxu0 %v646
    %648 = vmatprep.subr.mxu0 0.0
    %v649 = vand.u32 %v504, 4294901760
    %v650 = vsub.f32 %v504, %v649
    %v651 = vand.u32 %v650, 4294901760
    %v652 = vsub.f32 %v650, %v651
    %v653 = vand.u32 %v652, 4294901760
    %654 = vmatpush1.msra.mxu0 %v653
    %655 = vmatprep.subr.mxu0 0.0
    %v656 = vand.u32 %v505, 4294901760
    %v657 = vsub.f32 %v505, %v656
    %v658 = vand.u32 %v657, 4294901760
    %v659 = vsub.f32 %v657, %v658
    %v660 = vand.u32 %v659, 4294901760
    %661 = vmatpush1.msra.mxu0 %v660
    %662 = vmatprep.subr.mxu0 0.0
    %v663 = vand.u32 %v506, 4294901760
    %v664 = vsub.f32 %v506, %v663
    %v665 = vand.u32 %v664, 4294901760
    %v666 = vsub.f32 %v664, %v665
    %v667 = vand.u32 %v666, 4294901760
    %668 = vmatpush1.msra.mxu0 %v667
    %669 = vmatprep.subr.mxu0 0.0
    %v670 = vand.u32 %v507, 4294901760
    %v671 = vsub.f32 %v507, %v670
    %v672 = vand.u32 %v671, 4294901760
    %v673 = vsub.f32 %v671, %v672
    %v674 = vand.u32 %v673, 4294901760
    %675 = vmatpush1.msra.mxu0 %v674
    %676 = vmatprep.subr.mxu0 0.0
    %v677 = vand.u32 %v508, 4294901760
    %v678 = vsub.f32 %v508, %v677
    %v679 = vand.u32 %v678, 4294901760
    %v680 = vsub.f32 %v678, %v679
    %v681 = vand.u32 %v680, 4294901760
    %682 = vmatpush1.msra.mxu0 %v681
    %683 = vmatprep.subr.mxu0 0.0
    %v684 = vand.u32 %v509, 4294901760
    %v685 = vsub.f32 %v509, %v684
    %v686 = vand.u32 %v685, 4294901760
    %v687 = vsub.f32 %v685, %v686
    %v688 = vand.u32 %v687, 4294901760
    %689 = vmatpush1.msra.mxu0 %v688
    %690 = vmatprep.subr.mxu0 0.0
    %v691 = vand.u32 %v510, 4294901760
    %v692 = vsub.f32 %v510, %v691
    %v693 = vand.u32 %v692, 4294901760
    %v694 = vsub.f32 %v692, %v693
    %v695 = vand.u32 %v694, 4294901760
    %696 = vmatpush1.msra.mxu0 %v695
    %697 = vmatprep.subr.mxu0 0.0
    %v698 = vand.u32 %v511, 4294901760
    %v699 = vsub.f32 %v511, %v698
    %v700 = vand.u32 %v699, 4294901760
    %v701 = vsub.f32 %v699, %v700
    %v702 = vand.u32 %v701, 4294901760
    %703 = vmatpush1.msra.mxu0 %v702
    %704 = vmatprep.subr.mxu0 0.0
    %v705 = vand.u32 %v512, 4294901760
    %v706 = vsub.f32 %v512, %v705
    %v707 = vand.u32 %v706, 4294901760
    %v708 = vsub.f32 %v706, %v707
    %v709 = vand.u32 %v708, 4294901760
    %710 = vmatpush1.msra.mxu0 %v709
    %711 = vmatprep.subr.mxu0 0.0
    %v712 = vand.u32 %v513, 4294901760
    %v713 = vsub.f32 %v513, %v712
    %v714 = vand.u32 %v713, 4294901760
    %v715 = vsub.f32 %v713, %v714
    %v716 = vand.u32 %v715, 4294901760
    %717 = vmatpush1.msra.mxu0 %v716
    %718 = vmatprep.subr.mxu0 0.0
    %v719 = vand.u32 %v514, 4294901760
    %v720 = vsub.f32 %v514, %v719
    %v721 = vand.u32 %v720, 4294901760
    %v722 = vsub.f32 %v720, %v721
    %v723 = vand.u32 %v722, 4294901760
    %724 = vmatpush1.msra.mxu0 %v723
    %725 = vmatprep.subr.mxu0 0.0
    %726 = vmatpush1.msra.mxu0 0.0
    %727 = vmatprep.subr.mxu0 0.0
    %728 = vmatpush1.msra.mxu0 0.0
    %729 = vmatprep.subr.mxu0 0.0
    %730 = vmatpush1.msra.mxu0 0.0
    %731 = vmatprep.subr.mxu0 0.0
    %732 = vmatpush1.msra.mxu0 0.0
    %733 = vmatprep.subr.mxu0 0.0
    %734 = vmatpush1.msra.mxu0 0.0
    %735 = vmatprep.subr.mxu0 0.0
    %736 = vmatpush1.msra.mxu0 0.0
    %737 = vmatprep.subr.mxu0 0.0
    %738 = vmatpush1.msra.mxu0 0.0
    %739 = vmatprep.subr.mxu0 0.0
    %740 = vmatpush1.msra.mxu0 0.0
    %741 = vmatprep.subr.mxu0 0.0
    %742 = vmatpush1.msra.mxu0 0.0
    %743 = vmatprep.subr.mxu0 0.0
    %744 = vmatpush1.msra.mxu0 0.0
    %745 = vmatprep.subr.mxu0 0.0
    %746 = vmatpush1.msra.mxu0 0.0
    %747 = vmatprep.subr.mxu0 0.0
    %748 = vmatpush1.msra.mxu0 0.0
    %749 = vmatprep.subr.mxu0 0.0
    %750 = vmatpush1.msra.mxu0 0.0
    %751 = vmatprep.subr.mxu0 0.0
    %752 = vmatpush1.msra.mxu0 0.0
    %753 = vmatprep.subr.mxu0 0.0
    %754 = vmatpush1.msra.mxu0 0.0
    %755 = vmatprep.subr.mxu0 0.0
    %756 = vmatpush1.msra.mxu0 0.0
    %757 = vmatprep.mubr.f32.mxu0 0.0
    %v758 = vand.u32 %v498, 4294901760
    %759 = vmatmul.mubr.f32.gmra.mrb[0].mxu0 %v758
    %v760 = vpop.f32.mrb[0].mxu0
    %v761 = vadd.f32 %v610, %v760
    %v762 = vpop.f32.mrb[0].mxu0
    %763 = vdwg.mxu0
    %764 = vmatprep.subr.mxu0 0.0
    %v765 = vand.u32 %v499, 4294901760
    %v766 = vsub.f32 %v499, %v765
    %767 = vmatpush1.msra.mxu0 %v766
    %768 = vmatprep.subr.mxu0 0.0
    %v769 = vand.u32 %v500, 4294901760
    %v770 = vsub.f32 %v500, %v769
    %771 = vmatpush1.msra.mxu0 %v770
    %772 = vmatprep.subr.mxu0 0.0
    %v773 = vand.u32 %v501, 4294901760
    %v774 = vsub.f32 %v501, %v773
    %775 = vmatpush1.msra.mxu0 %v774
    %776 = vmatprep.subr.mxu0 0.0
    %v777 = vand.u32 %v502, 4294901760
    %v778 = vsub.f32 %v502, %v777
    %779 = vmatpush1.msra.mxu0 %v778
    %780 = vmatprep.subr.mxu0 0.0
    %v781 = vand.u32 %v503, 4294901760
    %v782 = vsub.f32 %v503, %v781
    %783 = vmatpush1.msra.mxu0 %v782
    %784 = vmatprep.subr.mxu0 0.0
    %v785 = vand.u32 %v504, 4294901760
    %v786 = vsub.f32 %v504, %v785
    %787 = vmatpush1.msra.mxu0 %v786
    %788 = vmatprep.subr.mxu0 0.0
    %v789 = vand.u32 %v505, 4294901760
    %v790 = vsub.f32 %v505, %v789
    %791 = vmatpush1.msra.mxu0 %v790
    %792 = vmatprep.subr.mxu0 0.0
    %v793 = vand.u32 %v506, 4294901760
    %v794 = vsub.f32 %v506, %v793
    %795 = vmatpush1.msra.mxu0 %v794
    %796 = vmatprep.subr.mxu0 0.0
    %v797 = vand.u32 %v507, 4294901760
    %v798 = vsub.f32 %v507, %v797
    %799 = vmatpush1.msra.mxu0 %v798
    %800 = vmatprep.subr.mxu0 0.0
    %v801 = vand.u32 %v508, 4294901760
    %v802 = vsub.f32 %v508, %v801
    %803 = vmatpush1.msra.mxu0 %v802
    %804 = vmatprep.subr.mxu0 0.0
    %v805 = vand.u32 %v509, 4294901760
    %v806 = vsub.f32 %v509, %v805
    %807 = vmatpush1.msra.mxu0 %v806
    %808 = vmatprep.subr.mxu0 0.0
    %v809 = vand.u32 %v510, 4294901760
    %v810 = vsub.f32 %v510, %v809
    %811 = vmatpush1.msra.mxu0 %v810
    %812 = vmatprep.subr.mxu0 0.0
    %v813 = vand.u32 %v511, 4294901760
    %v814 = vsub.f32 %v511, %v813
    %815 = vmatpush1.msra.mxu0 %v814
    %816 = vmatprep.subr.mxu0 0.0
    %v817 = vand.u32 %v512, 4294901760
    %v818 = vsub.f32 %v512, %v817
    %819 = vmatpush1.msra.mxu0 %v818
    %820 = vmatprep.subr.mxu0 0.0
    %v821 = vand.u32 %v513, 4294901760
    %v822 = vsub.f32 %v513, %v821
    %823 = vmatpush1.msra.mxu0 %v822
    %824 = vmatprep.subr.mxu0 0.0
    %v825 = vand.u32 %v514, 4294901760
    %v826 = vsub.f32 %v514, %v825
    %827 = vmatpush1.msra.mxu0 %v826
    %828 = vmatprep.subr.mxu0 0.0
    %829 = vmatpush1.msra.mxu0 0.0
    %830 = vmatprep.subr.mxu0 0.0
    %831 = vmatpush1.msra.mxu0 0.0
    %832 = vmatprep.subr.mxu0 0.0
    %833 = vmatpush1.msra.mxu0 0.0
    %834 = vmatprep.subr.mxu0 0.0
    %835 = vmatpush1.msra.mxu0 0.0
    %836 = vmatprep.subr.mxu0 0.0
    %837 = vmatpush1.msra.mxu0 0.0
    %838 = vmatprep.subr.mxu0 0.0
    %839 = vmatpush1.msra.mxu0 0.0
    %840 = vmatprep.subr.mxu0 0.0
    %841 = vmatpush1.msra.mxu0 0.0
    %842 = vmatprep.subr.mxu0 0.0
    %843 = vmatpush1.msra.mxu0 0.0
    %844 = vmatprep.subr.mxu0 0.0
    %845 = vmatpush1.msra.mxu0 0.0
    %846 = vmatprep.subr.mxu0 0.0
    %847 = vmatpush1.msra.mxu0 0.0
    %848 = vmatprep.subr.mxu0 0.0
    %849 = vmatpush1.msra.mxu0 0.0
    %850 = vmatprep.subr.mxu0 0.0
    %851 = vmatpush1.msra.mxu0 0.0
    %852 = vmatprep.subr.mxu0 0.0
    %853 = vmatpush1.msra.mxu0 0.0
    %854 = vmatprep.subr.mxu0 0.0
    %855 = vmatpush1.msra.mxu0 0.0
    %856 = vmatprep.subr.mxu0 0.0
    %857 = vmatpush1.msra.mxu0 0.0
    %858 = vmatprep.subr.mxu0 0.0
    %859 = vmatpush1.msra.mxu0 0.0
    %860 = vmatprep.mubr.f32.mxu0 0.0
    %v861 = vand.u32 %v498, 4294901760
    %v862 = vsub.f32 %v498, %v861
    %863 = vmatmul.mubr.f32.gmra.mrb[0].mxu0 %v862
    %v864 = vpop.f32.mrb[0].mxu0
    %v865 = vadd.f32 %v761, %v864
    %v866 = vpop.f32.mrb[0].mxu0
    %867 = vdwg.mxu0
    %868 = vmatprep.subr.mxu0 0.0
    %v869 = vand.u32 %v499, 4294901760
    %870 = vmatpush1.msra.mxu0 %v869
    %871 = vmatprep.subr.mxu0 0.0
    %v872 = vand.u32 %v500, 4294901760
    %873 = vmatpush1.msra.mxu0 %v872
    %874 = vmatprep.subr.mxu0 0.0
    %v875 = vand.u32 %v501, 4294901760
    %876 = vmatpush1.msra.mxu0 %v875
    %877 = vmatprep.subr.mxu0 0.0
    %v878 = vand.u32 %v502, 4294901760
    %879 = vmatpush1.msra.mxu0 %v878
    %880 = vmatprep.subr.mxu0 0.0
    %v881 = vand.u32 %v503, 4294901760
    %882 = vmatpush1.msra.mxu0 %v881
    %883 = vmatprep.subr.mxu0 0.0
    %v884 = vand.u32 %v504, 4294901760
    %885 = vmatpush1.msra.mxu0 %v884
    %886 = vmatprep.subr.mxu0 0.0
    %v887 = vand.u32 %v505, 4294901760
    %888 = vmatpush1.msra.mxu0 %v887
    %889 = vmatprep.subr.mxu0 0.0
    %v890 = vand.u32 %v506, 4294901760
    %891 = vmatpush1.msra.mxu0 %v890
    %892 = vmatprep.subr.mxu0 0.0
    %v893 = vand.u32 %v507, 4294901760
    %894 = vmatpush1.msra.mxu0 %v893
    %895 = vmatprep.subr.mxu0 0.0
    %v896 = vand.u32 %v508, 4294901760
    %897 = vmatpush1.msra.mxu0 %v896
    %898 = vmatprep.subr.mxu0 0.0
    %v899 = vand.u32 %v509, 4294901760
    %900 = vmatpush1.msra.mxu0 %v899
    %901 = vmatprep.subr.mxu0 0.0
    %v902 = vand.u32 %v510, 4294901760
    %903 = vmatpush1.msra.mxu0 %v902
    %904 = vmatprep.subr.mxu0 0.0
    %v905 = vand.u32 %v511, 4294901760
    %906 = vmatpush1.msra.mxu0 %v905
    %907 = vmatprep.subr.mxu0 0.0
    %v908 = vand.u32 %v512, 4294901760
    %909 = vmatpush1.msra.mxu0 %v908
    %910 = vmatprep.subr.mxu0 0.0
    %v911 = vand.u32 %v513, 4294901760
    %912 = vmatpush1.msra.mxu0 %v911
    %913 = vmatprep.subr.mxu0 0.0
    %v914 = vand.u32 %v514, 4294901760
    %915 = vmatpush1.msra.mxu0 %v914
    %916 = vmatprep.subr.mxu0 0.0
    %917 = vmatpush1.msra.mxu0 0.0
    %918 = vmatprep.subr.mxu0 0.0
    %919 = vmatpush1.msra.mxu0 0.0
    %920 = vmatprep.subr.mxu0 0.0
    %921 = vmatpush1.msra.mxu0 0.0
    %922 = vmatprep.subr.mxu0 0.0
    %923 = vmatpush1.msra.mxu0 0.0
    %924 = vmatprep.subr.mxu0 0.0
    %925 = vmatpush1.msra.mxu0 0.0
    %926 = vmatprep.subr.mxu0 0.0
    %927 = vmatpush1.msra.mxu0 0.0
    %928 = vmatprep.subr.mxu0 0.0
    %929 = vmatpush1.msra.mxu0 0.0
    %930 = vmatprep.subr.mxu0 0.0
    %931 = vmatpush1.msra.mxu0 0.0
    %932 = vmatprep.subr.mxu0 0.0
    %933 = vmatpush1.msra.mxu0 0.0
    %934 = vmatprep.subr.mxu0 0.0
    %935 = vmatpush1.msra.mxu0 0.0
    %936 = vmatprep.subr.mxu0 0.0
    %937 = vmatpush1.msra.mxu0 0.0
    %938 = vmatprep.subr.mxu0 0.0
    %939 = vmatpush1.msra.mxu0 0.0
    %940 = vmatprep.subr.mxu0 0.0
    %941 = vmatpush1.msra.mxu0 0.0
    %942 = vmatprep.subr.mxu0 0.0
    %943 = vmatpush1.msra.mxu0 0.0
    %944 = vmatprep.subr.mxu0 0.0
    %945 = vmatpush1.msra.mxu0 0.0
    %946 = vmatprep.subr.mxu0 0.0
    %947 = vmatpush1.msra.mxu0 0.0
    %948 = vmatprep.mubr.f32.mxu0 0.0
    %v949 = vand.u32 %v498, 4294901760
    %v950 = vsub.f32 %v498, %v949
    %v951 = vand.u32 %v950, 4294901760
    %952 = vmatmul.mubr.f32.gmra.mrb[0].mxu0 %v951
    %v953 = vpop.f32.mrb[0].mxu0
    %v954 = vadd.f32 %v865, %v953
    %v955 = vpop.f32.mrb[0].mxu0
    %956 = vdwg.mxu0
    %957 = vmatprep.subr.mxu0 0.0
    %v958 = vand.u32 %v499, 4294901760
    %v959 = vsub.f32 %v499, %v958
    %v960 = vand.u32 %v959, 4294901760
    %961 = vmatpush1.msra.mxu0 %v960
    %962 = vmatprep.subr.mxu0 0.0
    %v963 = vand.u32 %v500, 4294901760
    %v964 = vsub.f32 %v500, %v963
    %v965 = vand.u32 %v964, 4294901760
    %966 = vmatpush1.msra.mxu0 %v965
    %967 = vmatprep.subr.mxu0 0.0
    %v968 = vand.u32 %v501, 4294901760
    %v969 = vsub.f32 %v501, %v968
    %v970 = vand.u32 %v969, 4294901760
    %971 = vmatpush1.msra.mxu0 %v970
    %972 = vmatprep.subr.mxu0 0.0
    %v973 = vand.u32 %v502, 4294901760
    %v974 = vsub.f32 %v502, %v973
    %v975 = vand.u32 %v974, 4294901760
    %976 = vmatpush1.msra.mxu0 %v975
    %977 = vmatprep.subr.mxu0 0.0
    %v978 = vand.u32 %v503, 4294901760
    %v979 = vsub.f32 %v503, %v978
    %v980 = vand.u32 %v979, 4294901760
    %981 = vmatpush1.msra.mxu0 %v980
    %982 = vmatprep.subr.mxu0 0.0
    %v983 = vand.u32 %v504, 4294901760
    %v984 = vsub.f32 %v504, %v983
    %v985 = vand.u32 %v984, 4294901760
    %986 = vmatpush1.msra.mxu0 %v985
    %987 = vmatprep.subr.mxu0 0.0
    %v988 = vand.u32 %v505, 4294901760
    %v989 = vsub.f32 %v505, %v988
    %v990 = vand.u32 %v989, 4294901760
    %991 = vmatpush1.msra.mxu0 %v990
    %992 = vmatprep.subr.mxu0 0.0
    %v993 = vand.u32 %v506, 4294901760
    %v994 = vsub.f32 %v506, %v993
    %v995 = vand.u32 %v994, 4294901760
    %996 = vmatpush1.msra.mxu0 %v995
    %997 = vmatprep.subr.mxu0 0.0
    %v998 = vand.u32 %v507, 4294901760
    %v999 = vsub.f32 %v507, %v998
    %v1000 = vand.u32 %v999, 4294901760
    %1001 = vmatpush1.msra.mxu0 %v1000
    %1002 = vmatprep.subr.mxu0 0.0
    %v1003 = vand.u32 %v508, 4294901760
    %v1004 = vsub.f32 %v508, %v1003
    %v1005 = vand.u32 %v1004, 4294901760
    %1006 = vmatpush1.msra.mxu0 %v1005
    %1007 = vmatprep.subr.mxu0 0.0
    %v1008 = vand.u32 %v509, 4294901760
    %v1009 = vsub.f32 %v509, %v1008
    %v1010 = vand.u32 %v1009, 4294901760
    %1011 = vmatpush1.msra.mxu0 %v1010
    %1012 = vmatprep.subr.mxu0 0.0
    %v1013 = vand.u32 %v510, 4294901760
    %v1014 = vsub.f32 %v510, %v1013
    %v1015 = vand.u32 %v1014, 4294901760
    %1016 = vmatpush1.msra.mxu0 %v1015
    %1017 = vmatprep.subr.mxu0 0.0
    %v1018 = vand.u32 %v511, 4294901760
    %v1019 = vsub.f32 %v511, %v1018
    %v1020 = vand.u32 %v1019, 4294901760
    %1021 = vmatpush1.msra.mxu0 %v1020
    %1022 = vmatprep.subr.mxu0 0.0
    %v1023 = vand.u32 %v512, 4294901760
    %v1024 = vsub.f32 %v512, %v1023
    %v1025 = vand.u32 %v1024, 4294901760
    %1026 = vmatpush1.msra.mxu0 %v1025
    %1027 = vmatprep.subr.mxu0 0.0
    %v1028 = vand.u32 %v513, 4294901760
    %v1029 = vsub.f32 %v513, %v1028
    %v1030 = vand.u32 %v1029, 4294901760
    %1031 = vmatpush1.msra.mxu0 %v1030
    %1032 = vmatprep.subr.mxu0 0.0
    %v1033 = vand.u32 %v514, 4294901760
    %v1034 = vsub.f32 %v514, %v1033
    %v1035 = vand.u32 %v1034, 4294901760
    %1036 = vmatpush1.msra.mxu0 %v1035
    %1037 = vmatprep.subr.mxu0 0.0
    %1038 = vmatpush1.msra.mxu0 0.0
    %1039 = vmatprep.subr.mxu0 0.0
    %1040 = vmatpush1.msra.mxu0 0.0
    %1041 = vmatprep.subr.mxu0 0.0
    %1042 = vmatpush1.msra.mxu0 0.0
    %1043 = vmatprep.subr.mxu0 0.0
    %1044 = vmatpush1.msra.mxu0 0.0
    %1045 = vmatprep.subr.mxu0 0.0
    %1046 = vmatpush1.msra.mxu0 0.0
    %1047 = vmatprep.subr.mxu0 0.0
    %1048 = vmatpush1.msra.mxu0 0.0
    %1049 = vmatprep.subr.mxu0 0.0
    %1050 = vmatpush1.msra.mxu0 0.0
    %1051 = vmatprep.subr.mxu0 0.0
    %1052 = vmatpush1.msra.mxu0 0.0
    %1053 = vmatprep.subr.mxu0 0.0
    %1054 = vmatpush1.msra.mxu0 0.0
    %1055 = vmatprep.subr.mxu0 0.0
    %1056 = vmatpush1.msra.mxu0 0.0
    %1057 = vmatprep.subr.mxu0 0.0
    %1058 = vmatpush1.msra.mxu0 0.0
    %1059 = vmatprep.subr.mxu0 0.0
    %1060 = vmatpush1.msra.mxu0 0.0
    %1061 = vmatprep.subr.mxu0 0.0
    %1062 = vmatpush1.msra.mxu0 0.0
    %1063 = vmatprep.subr.mxu0 0.0
    %1064 = vmatpush1.msra.mxu0 0.0
    %1065 = vmatprep.subr.mxu0 0.0
    %1066 = vmatpush1.msra.mxu0 0.0
    %1067 = vmatprep.subr.mxu0 0.0
    %1068 = vmatpush1.msra.mxu0 0.0
    %1069 = vmatprep.mubr.f32.mxu0 0.0
    %v1070 = vand.u32 %v498, 4294901760
    %1071 = vmatmul.mubr.f32.gmra.mrb[0].mxu0 %v1070
    %v1072 = vpop.f32.mrb[0].mxu0
    %v1073 = vadd.f32 %v954, %v1072
    %v1074 = vpop.f32.mrb[0].mxu0
    %1075 = vdwg.mxu0
    %1076 = vmatprep.subr.mxu0 0.0
    %v1077 = vand.u32 %v499, 4294901760
    %1078 = vmatpush1.msra.mxu0 %v1077
    %1079 = vmatprep.subr.mxu0 0.0
    %v1080 = vand.u32 %v500, 4294901760
    %1081 = vmatpush1.msra.mxu0 %v1080
    %1082 = vmatprep.subr.mxu0 0.0
    %v1083 = vand.u32 %v501, 4294901760
    %1084 = vmatpush1.msra.mxu0 %v1083
    %1085 = vmatprep.subr.mxu0 0.0
    %v1086 = vand.u32 %v502, 4294901760
    %1087 = vmatpush1.msra.mxu0 %v1086
    %1088 = vmatprep.subr.mxu0 0.0
    %v1089 = vand.u32 %v503, 4294901760
    %1090 = vmatpush1.msra.mxu0 %v1089
    %1091 = vmatprep.subr.mxu0 0.0
    %v1092 = vand.u32 %v504, 4294901760
    %1093 = vmatpush1.msra.mxu0 %v1092
    %1094 = vmatprep.subr.mxu0 0.0
    %v1095 = vand.u32 %v505, 4294901760
    %1096 = vmatpush1.msra.mxu0 %v1095
    %1097 = vmatprep.subr.mxu0 0.0
    %v1098 = vand.u32 %v506, 4294901760
    %1099 = vmatpush1.msra.mxu0 %v1098
    %1100 = vmatprep.subr.mxu0 0.0
    %v1101 = vand.u32 %v507, 4294901760
    %1102 = vmatpush1.msra.mxu0 %v1101
    %1103 = vmatprep.subr.mxu0 0.0
    %v1104 = vand.u32 %v508, 4294901760
    %1105 = vmatpush1.msra.mxu0 %v1104
    %1106 = vmatprep.subr.mxu0 0.0
    %v1107 = vand.u32 %v509, 4294901760
    %1108 = vmatpush1.msra.mxu0 %v1107
    %1109 = vmatprep.subr.mxu0 0.0
    %v1110 = vand.u32 %v510, 4294901760
    %1111 = vmatpush1.msra.mxu0 %v1110
    %1112 = vmatprep.subr.mxu0 0.0
    %v1113 = vand.u32 %v511, 4294901760
    %1114 = vmatpush1.msra.mxu0 %v1113
    %1115 = vmatprep.subr.mxu0 0.0
    %v1116 = vand.u32 %v512, 4294901760
    %1117 = vmatpush1.msra.mxu0 %v1116
    %1118 = vmatprep.subr.mxu0 0.0
    %v1119 = vand.u32 %v513, 4294901760
    %1120 = vmatpush1.msra.mxu0 %v1119
    %1121 = vmatprep.subr.mxu0 0.0
    %v1122 = vand.u32 %v514, 4294901760
    %1123 = vmatpush1.msra.mxu0 %v1122
    %1124 = vmatprep.subr.mxu0 0.0
    %1125 = vmatpush1.msra.mxu0 0.0
    %1126 = vmatprep.subr.mxu0 0.0
    %1127 = vmatpush1.msra.mxu0 0.0
    %1128 = vmatprep.subr.mxu0 0.0
    %1129 = vmatpush1.msra.mxu0 0.0
    %1130 = vmatprep.subr.mxu0 0.0
    %1131 = vmatpush1.msra.mxu0 0.0
    %1132 = vmatprep.subr.mxu0 0.0
    %1133 = vmatpush1.msra.mxu0 0.0
    %1134 = vmatprep.subr.mxu0 0.0
    %1135 = vmatpush1.msra.mxu0 0.0
    %1136 = vmatprep.subr.mxu0 0.0
    %1137 = vmatpush1.msra.mxu0 0.0
    %1138 = vmatprep.subr.mxu0 0.0
    %1139 = vmatpush1.msra.mxu0 0.0
    %1140 = vmatprep.subr.mxu0 0.0
    %1141 = vmatpush1.msra.mxu0 0.0
    %1142 = vmatprep.subr.mxu0 0.0
    %1143 = vmatpush1.msra.mxu0 0.0
    %1144 = vmatprep.subr.mxu0 0.0
    %1145 = vmatpush1.msra.mxu0 0.0
    %1146 = vmatprep.subr.mxu0 0.0
    %1147 = vmatpush1.msra.mxu0 0.0
    %1148 = vmatprep.subr.mxu0 0.0
    %1149 = vmatpush1.msra.mxu0 0.0
    %1150 = vmatprep.subr.mxu0 0.0
    %1151 = vmatpush1.msra.mxu0 0.0
    %1152 = vmatprep.subr.mxu0 0.0
    %1153 = vmatpush1.msra.mxu0 0.0
    %1154 = vmatprep.subr.mxu0 0.0
    %1155 = vmatpush1.msra.mxu0 0.0
    %1156 = vmatprep.mubr.f32.mxu0 0.0
    %v1157 = vand.u32 %v498, 4294901760
    %1158 = vmatmul.mubr.f32.gmra.mrb[0].mxu0 %v1157
    %v1159 = vpop.f32.mrb[0].mxu0
    %v1160 = vadd.f32 %v1073, %v1159
    %v1161 = vpop.f32.mrb[0].mxu0
    %1162 = vdwg.mxu0
    %v1163 = vmax.f32 %v1160, 0.0
    %v1164 = vld [vmem:[%s5] sm:$0xff]
    %v1165 = vld [vmem:[%s5 + $0x8] sm:$0xff]
    %v1166 = vld [vmem:[%s5 + $0x10] sm:$0xff]
    %v1167 = vld [vmem:[%s5 + $0x18] sm:$0xff]
    %v1168 = vld [vmem:[%s5 + $0x20] sm:$0xff]
    %v1169 = vld [vmem:[%s5 + $0x28] sm:$0xff]
    %v1170 = vld [vmem:[%s5 + $0x30] sm:$0xff]
    %v1171 = vld [vmem:[%s5 + $0x38] sm:$0xff]
    %v1172 = vld [vmem:[%s5 + $0x40] sm:$0xff]
    %v1173 = vld [vmem:[%s5 + $0x48] sm:$0xff]
    %v1174 = vld [vmem:[%s5 + $0x50] sm:$0xff]
    %v1175 = vld [vmem:[%s5 + $0x58] sm:$0xff]
    %v1176 = vld [vmem:[%s5 + $0x60] sm:$0xff]
    %v1177 = vld [vmem:[%s5 + $0x68] sm:$0xff]
    %v1178 = vld [vmem:[%s5 + $0x70] sm:$0xff]
    %v1179 = vld [vmem:[%s5 + $0x78] sm:$0xff]
    %v1180 = vld [vmem:[%s6] sm:$0x1]
    %v1182 = vlaneseq
    %v1183 = vshrl.u32 %v1182, 7
    %v1184 = vsub.s32 0, %v1183
    %v1185 = vrot.slane %v1180, %v1184
    %1187 = vmatprep.subr.mxu0 0.0
    %v1188 = vand.u32 %v1164, 4294901760
    %1189 = vmatpush1.msra.mxu0 %v1188
    %1190 = vmatprep.subr.mxu0 0.0
    %v1191 = vand.u32 %v1165, 4294901760
    %1192 = vmatpush1.msra.mxu0 %v1191
    %1193 = vmatprep.subr.mxu0 0.0
    %v1194 = vand.u32 %v1166, 4294901760
    %1195 = vmatpush1.msra.mxu0 %v1194
    %1196 = vmatprep.subr.mxu0 0.0
    %v1197 = vand.u32 %v1167, 4294901760
    %1198 = vmatpush1.msra.mxu0 %v1197
    %1199 = vmatprep.subr.mxu0 0.0
    %v1200 = vand.u32 %v1168, 4294901760
    %1201 = vmatpush1.msra.mxu0 %v1200
    %1202 = vmatprep.subr.mxu0 0.0
    %v1203 = vand.u32 %v1169, 4294901760
    %1204 = vmatpush1.msra.mxu0 %v1203
    %1205 = vmatprep.subr.mxu0 0.0
    %v1206 = vand.u32 %v1170, 4294901760
    %1207 = vmatpush1.msra.mxu0 %v1206
    %1208 = vmatprep.subr.mxu0 0.0
    %v1209 = vand.u32 %v1171, 4294901760
    %1210 = vmatpush1.msra.mxu0 %v1209
    %1211 = vmatprep.subr.mxu0 0.0
    %v1212 = vand.u32 %v1172, 4294901760
    %1213 = vmatpush1.msra.mxu0 %v1212
    %1214 = vmatprep.subr.mxu0 0.0
    %v1215 = vand.u32 %v1173, 4294901760
    %1216 = vmatpush1.msra.mxu0 %v1215
    %1217 = vmatprep.subr.mxu0 0.0
    %v1218 = vand.u32 %v1174, 4294901760
    %1219 = vmatpush1.msra.mxu0 %v1218
    %1220 = vmatprep.subr.mxu0 0.0
    %v1221 = vand.u32 %v1175, 4294901760
    %1222 = vmatpush1.msra.mxu0 %v1221
    %1223 = vmatprep.subr.mxu0 0.0
    %v1224 = vand.u32 %v1176, 4294901760
    %1225 = vmatpush1.msra.mxu0 %v1224
    %1226 = vmatprep.subr.mxu0 0.0
    %v1227 = vand.u32 %v1177, 4294901760
    %1228 = vmatpush1.msra.mxu0 %v1227
    %1229 = vmatprep.subr.mxu0 0.0
    %v1230 = vand.u32 %v1178, 4294901760
    %1231 = vmatpush1.msra.mxu0 %v1230
    %1232 = vmatprep.subr.mxu0 0.0
    %v1233 = vand.u32 %v1179, 4294901760
    %1234 = vmatpush1.msra.mxu0 %v1233
    %1235 = vmatprep.subr.mxu0 0.0
    %1236 = vmatpush1.msra.mxu0 0.0
    %1237 = vmatprep.subr.mxu0 0.0
    %1238 = vmatpush1.msra.mxu0 0.0
    %1239 = vmatprep.subr.mxu0 0.0
    %1240 = vmatpush1.msra.mxu0 0.0
    %1241 = vmatprep.subr.mxu0 0.0
    %1242 = vmatpush1.msra.mxu0 0.0
    %1243 = vmatprep.subr.mxu0 0.0
    %1244 = vmatpush1.msra.mxu0 0.0
    %1245 = vmatprep.subr.mxu0 0.0
    %1246 = vmatpush1.msra.mxu0 0.0
    %1247 = vmatprep.subr.mxu0 0.0
    %1248 = vmatpush1.msra.mxu0 0.0
    %1249 = vmatprep.subr.mxu0 0.0
    %1250 = vmatpush1.msra.mxu0 0.0
    %1251 = vmatprep.subr.mxu0 0.0
    %1252 = vmatpush1.msra.mxu0 0.0
    %1253 = vmatprep.subr.mxu0 0.0
    %1254 = vmatpush1.msra.mxu0 0.0
    %1255 = vmatprep.subr.mxu0 0.0
    %1256 = vmatpush1.msra.mxu0 0.0
    %1257 = vmatprep.subr.mxu0 0.0
    %1258 = vmatpush1.msra.mxu0 0.0
    %1259 = vmatprep.subr.mxu0 0.0
    %1260 = vmatpush1.msra.mxu0 0.0
    %1261 = vmatprep.subr.mxu0 0.0
    %1262 = vmatpush1.msra.mxu0 0.0
    %1263 = vmatprep.subr.mxu0 0.0
    %1264 = vmatpush1.msra.mxu0 0.0
    %1265 = vmatprep.subr.mxu0 0.0
    %1266 = vmatpush1.msra.mxu0 0.0
    %1267 = vmatprep.mubr.f32.mxu0 0.0
    %v1268 = vand.u32 %v1163, 4294901760
    %v1269 = vsub.f32 %v1163, %v1268
    %v1270 = vand.u32 %v1269, 4294901760
    %v1271 = vsub.f32 %v1269, %v1270
    %v1272 = vand.u32 %v1271, 4294901760
    %1273 = vmatmul.mubr.f32.gmra.mrb[0].mxu0 %v1272
    %v1274 = vpop.f32.mrb[0].mxu0
    %v1275 = vadd.f32 %v1185, %v1274
    %v1276 = vpop.f32.mrb[0].mxu0
    %1277 = vdwg.mxu0
    %1278 = vmatprep.subr.mxu0 0.0
    %v1279 = vand.u32 %v1164, 4294901760
    %v1280 = vsub.f32 %v1164, %v1279
    %v1281 = vand.u32 %v1280, 4294901760
    %v1282 = vsub.f32 %v1280, %v1281
    %v1283 = vand.u32 %v1282, 4294901760
    %1284 = vmatpush1.msra.mxu0 %v1283
    %1285 = vmatprep.subr.mxu0 0.0
    %v1286 = vand.u32 %v1165, 4294901760
    %v1287 = vsub.f32 %v1165, %v1286
    %v1288 = vand.u32 %v1287, 4294901760
    %v1289 = vsub.f32 %v1287, %v1288
    %v1290 = vand.u32 %v1289, 4294901760
    %1291 = vmatpush1.msra.mxu0 %v1290
    %1292 = vmatprep.subr.mxu0 0.0
    %v1293 = vand.u32 %v1166, 4294901760
    %v1294 = vsub.f32 %v1166, %v1293
    %v1295 = vand.u32 %v1294, 4294901760
    %v1296 = vsub.f32 %v1294, %v1295
    %v1297 = vand.u32 %v1296, 4294901760
    %1298 = vmatpush1.msra.mxu0 %v1297
    %1299 = vmatprep.subr.mxu0 0.0
    %v1300 = vand.u32 %v1167, 4294901760
    %v1301 = vsub.f32 %v1167, %v1300
    %v1302 = vand.u32 %v1301, 4294901760
    %v1303 = vsub.f32 %v1301, %v1302
    %v1304 = vand.u32 %v1303, 4294901760
    %1305 = vmatpush1.msra.mxu0 %v1304
    %1306 = vmatprep.subr.mxu0 0.0
    %v1307 = vand.u32 %v1168, 4294901760
    %v1308 = vsub.f32 %v1168, %v1307
    %v1309 = vand.u32 %v1308, 4294901760
    %v1310 = vsub.f32 %v1308, %v1309
    %v1311 = vand.u32 %v1310, 4294901760
    %1312 = vmatpush1.msra.mxu0 %v1311
    %1313 = vmatprep.subr.mxu0 0.0
    %v1314 = vand.u32 %v1169, 4294901760
    %v1315 = vsub.f32 %v1169, %v1314
    %v1316 = vand.u32 %v1315, 4294901760
    %v1317 = vsub.f32 %v1315, %v1316
    %v1318 = vand.u32 %v1317, 4294901760
    %1319 = vmatpush1.msra.mxu0 %v1318
    %1320 = vmatprep.subr.mxu0 0.0
    %v1321 = vand.u32 %v1170, 4294901760
    %v1322 = vsub.f32 %v1170, %v1321
    %v1323 = vand.u32 %v1322, 4294901760
    %v1324 = vsub.f32 %v1322, %v1323
    %v1325 = vand.u32 %v1324, 4294901760
    %1326 = vmatpush1.msra.mxu0 %v1325
    %1327 = vmatprep.subr.mxu0 0.0
    %v1328 = vand.u32 %v1171, 4294901760
    %v1329 = vsub.f32 %v1171, %v1328
    %v1330 = vand.u32 %v1329, 4294901760
    %v1331 = vsub.f32 %v1329, %v1330
    %v1332 = vand.u32 %v1331, 4294901760
    %1333 = vmatpush1.msra.mxu0 %v1332
    %1334 = vmatprep.subr.mxu0 0.0
    %v1335 = vand.u32 %v1172, 4294901760
    %v1336 = vsub.f32 %v1172, %v1335
    %v1337 = vand.u32 %v1336, 4294901760
    %v1338 = vsub.f32 %v1336, %v1337
    %v1339 = vand.u32 %v1338, 4294901760
    %1340 = vmatpush1.msra.mxu0 %v1339
    %1341 = vmatprep.subr.mxu0 0.0
    %v1342 = vand.u32 %v1173, 4294901760
    %v1343 = vsub.f32 %v1173, %v1342
    %v1344 = vand.u32 %v1343, 4294901760
    %v1345 = vsub.f32 %v1343, %v1344
    %v1346 = vand.u32 %v1345, 4294901760
    %1347 = vmatpush1.msra.mxu0 %v1346
    %1348 = vmatprep.subr.mxu0 0.0
    %v1349 = vand.u32 %v1174, 4294901760
    %v1350 = vsub.f32 %v1174, %v1349
    %v1351 = vand.u32 %v1350, 4294901760
    %v1352 = vsub.f32 %v1350, %v1351
    %v1353 = vand.u32 %v1352, 4294901760
    %1354 = vmatpush1.msra.mxu0 %v1353
    %1355 = vmatprep.subr.mxu0 0.0
    %v1356 = vand.u32 %v1175, 4294901760
    %v1357 = vsub.f32 %v1175, %v1356
    %v1358 = vand.u32 %v1357, 4294901760
    %v1359 = vsub.f32 %v1357, %v1358
    %v1360 = vand.u32 %v1359, 4294901760
    %1361 = vmatpush1.msra.mxu0 %v1360
    %1362 = vmatprep.subr.mxu0 0.0
    %v1363 = vand.u32 %v1176, 4294901760
    %v1364 = vsub.f32 %v1176, %v1363
    %v1365 = vand.u32 %v1364, 4294901760
    %v1366 = vsub.f32 %v1364, %v1365
    %v1367 = vand.u32 %v1366, 4294901760
    %1368 = vmatpush1.msra.mxu0 %v1367
    %1369 = vmatprep.subr.mxu0 0.0
    %v1370 = vand.u32 %v1177, 4294901760
    %v1371 = vsub.f32 %v1177, %v1370
    %v1372 = vand.u32 %v1371, 4294901760
    %v1373 = vsub.f32 %v1371, %v1372
    %v1374 = vand.u32 %v1373, 4294901760
    %1375 = vmatpush1.msra.mxu0 %v1374
    %1376 = vmatprep.subr.mxu0 0.0
    %v1377 = vand.u32 %v1178, 4294901760
    %v1378 = vsub.f32 %v1178, %v1377
    %v1379 = vand.u32 %v1378, 4294901760
    %v1380 = vsub.f32 %v1378, %v1379
    %v1381 = vand.u32 %v1380, 4294901760
    %1382 = vmatpush1.msra.mxu0 %v1381
    %1383 = vmatprep.subr.mxu0 0.0
    %v1384 = vand.u32 %v1179, 4294901760
    %v1385 = vsub.f32 %v1179, %v1384
    %v1386 = vand.u32 %v1385, 4294901760
    %v1387 = vsub.f32 %v1385, %v1386
    %v1388 = vand.u32 %v1387, 4294901760
    %1389 = vmatpush1.msra.mxu0 %v1388
    %1390 = vmatprep.subr.mxu0 0.0
    %1391 = vmatpush1.msra.mxu0 0.0
    %1392 = vmatprep.subr.mxu0 0.0
    %1393 = vmatpush1.msra.mxu0 0.0
    %1394 = vmatprep.subr.mxu0 0.0
    %1395 = vmatpush1.msra.mxu0 0.0
    %1396 = vmatprep.subr.mxu0 0.0
    %1397 = vmatpush1.msra.mxu0 0.0
    %1398 = vmatprep.subr.mxu0 0.0
    %1399 = vmatpush1.msra.mxu0 0.0
    %1400 = vmatprep.subr.mxu0 0.0
    %1401 = vmatpush1.msra.mxu0 0.0
    %1402 = vmatprep.subr.mxu0 0.0
    %1403 = vmatpush1.msra.mxu0 0.0
    %1404 = vmatprep.subr.mxu0 0.0
    %1405 = vmatpush1.msra.mxu0 0.0
    %1406 = vmatprep.subr.mxu0 0.0
    %1407 = vmatpush1.msra.mxu0 0.0
    %1408 = vmatprep.subr.mxu0 0.0
    %1409 = vmatpush1.msra.mxu0 0.0
    %1410 = vmatprep.subr.mxu0 0.0
    %1411 = vmatpush1.msra.mxu0 0.0
    %1412 = vmatprep.subr.mxu0 0.0
    %1413 = vmatpush1.msra.mxu0 0.0
    %1414 = vmatprep.subr.mxu0 0.0
    %1415 = vmatpush1.msra.mxu0 0.0
    %1416 = vmatprep.subr.mxu0 0.0
    %1417 = vmatpush1.msra.mxu0 0.0
    %1418 = vmatprep.subr.mxu0 0.0
    %1419 = vmatpush1.msra.mxu0 0.0
    %1420 = vmatprep.subr.mxu0 0.0
    %1421 = vmatpush1.msra.mxu0 0.0
    %1422 = vmatprep.mubr.f32.mxu0 0.0
    %v1423 = vand.u32 %v1163, 4294901760
    %1424 = vmatmul.mubr.f32.gmra.mrb[0].mxu0 %v1423
    %v1425 = vpop.f32.mrb[0].mxu0
    %v1426 = vadd.f32 %v1275, %v1425
    %v1427 = vpop.f32.mrb[0].mxu0
    %1428 = vdwg.mxu0
    %1429 = vmatprep.subr.mxu0 0.0
    %v1430 = vand.u32 %v1164, 4294901760
    %v1431 = vsub.f32 %v1164, %v1430
    %1432 = vmatpush1.msra.mxu0 %v1431
    %1433 = vmatprep.subr.mxu0 0.0
    %v1434 = vand.u32 %v1165, 4294901760
    %v1435 = vsub.f32 %v1165, %v1434
    %1436 = vmatpush1.msra.mxu0 %v1435
    %1437 = vmatprep.subr.mxu0 0.0
    %v1438 = vand.u32 %v1166, 4294901760
    %v1439 = vsub.f32 %v1166, %v1438
    %1440 = vmatpush1.msra.mxu0 %v1439
    %1441 = vmatprep.subr.mxu0 0.0
    %v1442 = vand.u32 %v1167, 4294901760
    %v1443 = vsub.f32 %v1167, %v1442
    %1444 = vmatpush1.msra.mxu0 %v1443
    %1445 = vmatprep.subr.mxu0 0.0
    %v1446 = vand.u32 %v1168, 4294901760
    %v1447 = vsub.f32 %v1168, %v1446
    %1448 = vmatpush1.msra.mxu0 %v1447
    %1449 = vmatprep.subr.mxu0 0.0
    %v1450 = vand.u32 %v1169, 4294901760
    %v1451 = vsub.f32 %v1169, %v1450
    %1452 = vmatpush1.msra.mxu0 %v1451
    %1453 = vmatprep.subr.mxu0 0.0
    %v1454 = vand.u32 %v1170, 4294901760
    %v1455 = vsub.f32 %v1170, %v1454
    %1456 = vmatpush1.msra.mxu0 %v1455
    %1457 = vmatprep.subr.mxu0 0.0
    %v1458 = vand.u32 %v1171, 4294901760
    %v1459 = vsub.f32 %v1171, %v1458
    %1460 = vmatpush1.msra.mxu0 %v1459
    %1461 = vmatprep.subr.mxu0 0.0
    %v1462 = vand.u32 %v1172, 4294901760
    %v1463 = vsub.f32 %v1172, %v1462
    %1464 = vmatpush1.msra.mxu0 %v1463
    %1465 = vmatprep.subr.mxu0 0.0
    %v1466 = vand.u32 %v1173, 4294901760
    %v1467 = vsub.f32 %v1173, %v1466
    %1468 = vmatpush1.msra.mxu0 %v1467
    %1469 = vmatprep.subr.mxu0 0.0
    %v1470 = vand.u32 %v1174, 4294901760
    %v1471 = vsub.f32 %v1174, %v1470
    %1472 = vmatpush1.msra.mxu0 %v1471
    %1473 = vmatprep.subr.mxu0 0.0
    %v1474 = vand.u32 %v1175, 4294901760
    %v1475 = vsub.f32 %v1175, %v1474
    %1476 = vmatpush1.msra.mxu0 %v1475
    %1477 = vmatprep.subr.mxu0 0.0
    %v1478 = vand.u32 %v1176, 4294901760
    %v1479 = vsub.f32 %v1176, %v1478
    %1480 = vmatpush1.msra.mxu0 %v1479
    %1481 = vmatprep.subr.mxu0 0.0
    %v1482 = vand.u32 %v1177, 4294901760
    %v1483 = vsub.f32 %v1177, %v1482
    %1484 = vmatpush1.msra.mxu0 %v1483
    %1485 = vmatprep.subr.mxu0 0.0
    %v1486 = vand.u32 %v1178, 4294901760
    %v1487 = vsub.f32 %v1178, %v1486
    %1488 = vmatpush1.msra.mxu0 %v1487
    %1489 = vmatprep.subr.mxu0 0.0
    %v1490 = vand.u32 %v1179, 4294901760
    %v1491 = vsub.f32 %v1179, %v1490
    %1492 = vmatpush1.msra.mxu0 %v1491
    %1493 = vmatprep.subr.mxu0 0.0
    %1494 = vmatpush1.msra.mxu0 0.0
    %1495 = vmatprep.subr.mxu0 0.0
    %1496 = vmatpush1.msra.mxu0 0.0
    %1497 = vmatprep.subr.mxu0 0.0
    %1498 = vmatpush1.msra.mxu0 0.0
    %1499 = vmatprep.subr.mxu0 0.0
    %1500 = vmatpush1.msra.mxu0 0.0
    %1501 = vmatprep.subr.mxu0 0.0
    %1502 = vmatpush1.msra.mxu0 0.0
    %1503 = vmatprep.subr.mxu0 0.0
    %1504 = vmatpush1.msra.mxu0 0.0
    %1505 = vmatprep.subr.mxu0 0.0
    %1506 = vmatpush1.msra.mxu0 0.0
    %1507 = vmatprep.subr.mxu0 0.0
    %1508 = vmatpush1.msra.mxu0 0.0
    %1509 = vmatprep.subr.mxu0 0.0
    %1510 = vmatpush1.msra.mxu0 0.0
    %1511 = vmatprep.subr.mxu0 0.0
    %1512 = vmatpush1.msra.mxu0 0.0
    %1513 = vmatprep.subr.mxu0 0.0
    %1514 = vmatpush1.msra.mxu0 0.0
    %1515 = vmatprep.subr.mxu0 0.0
    %1516 = vmatpush1.msra.mxu0 0.0
    %1517 = vmatprep.subr.mxu0 0.0
    %1518 = vmatpush1.msra.mxu0 0.0
    %1519 = vmatprep.subr.mxu0 0.0
    %1520 = vmatpush1.msra.mxu0 0.0
    %1521 = vmatprep.subr.mxu0 0.0
    %1522 = vmatpush1.msra.mxu0 0.0
    %1523 = vmatprep.subr.mxu0 0.0
    %1524 = vmatpush1.msra.mxu0 0.0
    %1525 = vmatprep.mubr.f32.mxu0 0.0
    %v1526 = vand.u32 %v1163, 4294901760
    %v1527 = vsub.f32 %v1163, %v1526
    %1528 = vmatmul.mubr.f32.gmra.mrb[0].mxu0 %v1527
    %v1529 = vpop.f32.mrb[0].mxu0
    %v1530 = vadd.f32 %v1426, %v1529
    %v1531 = vpop.f32.mrb[0].mxu0
    %1532 = vdwg.mxu0
    %1533 = vmatprep.subr.mxu0 0.0
    %v1534 = vand.u32 %v1164, 4294901760
    %1535 = vmatpush1.msra.mxu0 %v1534
    %1536 = vmatprep.subr.mxu0 0.0
    %v1537 = vand.u32 %v1165, 4294901760
    %1538 = vmatpush1.msra.mxu0 %v1537
    %1539 = vmatprep.subr.mxu0 0.0
    %v1540 = vand.u32 %v1166, 4294901760
    %1541 = vmatpush1.msra.mxu0 %v1540
    %1542 = vmatprep.subr.mxu0 0.0
    %v1543 = vand.u32 %v1167, 4294901760
    %1544 = vmatpush1.msra.mxu0 %v1543
    %1545 = vmatprep.subr.mxu0 0.0
    %v1546 = vand.u32 %v1168, 4294901760
    %1547 = vmatpush1.msra.mxu0 %v1546
    %1548 = vmatprep.subr.mxu0 0.0
    %v1549 = vand.u32 %v1169, 4294901760
    %1550 = vmatpush1.msra.mxu0 %v1549
    %1551 = vmatprep.subr.mxu0 0.0
    %v1552 = vand.u32 %v1170, 4294901760
    %1553 = vmatpush1.msra.mxu0 %v1552
    %1554 = vmatprep.subr.mxu0 0.0
    %v1555 = vand.u32 %v1171, 4294901760
    %1556 = vmatpush1.msra.mxu0 %v1555
    %1557 = vmatprep.subr.mxu0 0.0
    %v1558 = vand.u32 %v1172, 4294901760
    %1559 = vmatpush1.msra.mxu0 %v1558
    %1560 = vmatprep.subr.mxu0 0.0
    %v1561 = vand.u32 %v1173, 4294901760
    %1562 = vmatpush1.msra.mxu0 %v1561
    %1563 = vmatprep.subr.mxu0 0.0
    %v1564 = vand.u32 %v1174, 4294901760
    %1565 = vmatpush1.msra.mxu0 %v1564
    %1566 = vmatprep.subr.mxu0 0.0
    %v1567 = vand.u32 %v1175, 4294901760
    %1568 = vmatpush1.msra.mxu0 %v1567
    %1569 = vmatprep.subr.mxu0 0.0
    %v1570 = vand.u32 %v1176, 4294901760
    %1571 = vmatpush1.msra.mxu0 %v1570
    %1572 = vmatprep.subr.mxu0 0.0
    %v1573 = vand.u32 %v1177, 4294901760
    %1574 = vmatpush1.msra.mxu0 %v1573
    %1575 = vmatprep.subr.mxu0 0.0
    %v1576 = vand.u32 %v1178, 4294901760
    %1577 = vmatpush1.msra.mxu0 %v1576
    %1578 = vmatprep.subr.mxu0 0.0
    %v1579 = vand.u32 %v1179, 4294901760
    %1580 = vmatpush1.msra.mxu0 %v1579
    %1581 = vmatprep.subr.mxu0 0.0
    %1582 = vmatpush1.msra.mxu0 0.0
    %1583 = vmatprep.subr.mxu0 0.0
    %1584 = vmatpush1.msra.mxu0 0.0
    %1585 = vmatprep.subr.mxu0 0.0
    %1586 = vmatpush1.msra.mxu0 0.0
    %1587 = vmatprep.subr.mxu0 0.0
    %1588 = vmatpush1.msra.mxu0 0.0
    %1589 = vmatprep.subr.mxu0 0.0
    %1590 = vmatpush1.msra.mxu0 0.0
    %1591 = vmatprep.subr.mxu0 0.0
    %1592 = vmatpush1.msra.mxu0 0.0
    %1593 = vmatprep.subr.mxu0 0.0
    %1594 = vmatpush1.msra.mxu0 0.0
    %1595 = vmatprep.subr.mxu0 0.0
    %1596 = vmatpush1.msra.mxu0 0.0
    %1597 = vmatprep.subr.mxu0 0.0
    %1598 = vmatpush1.msra.mxu0 0.0
    %1599 = vmatprep.subr.mxu0 0.0
    %1600 = vmatpush1.msra.mxu0 0.0
    %1601 = vmatprep.subr.mxu0 0.0
    %1602 = vmatpush1.msra.mxu0 0.0
    %1603 = vmatprep.subr.mxu0 0.0
    %1604 = vmatpush1.msra.mxu0 0.0
    %1605 = vmatprep.subr.mxu0 0.0
    %1606 = vmatpush1.msra.mxu0 0.0
    %1607 = vmatprep.subr.mxu0 0.0
    %1608 = vmatpush1.msra.mxu0 0.0
    %1609 = vmatprep.subr.mxu0 0.0
    %1610 = vmatpush1.msra.mxu0 0.0
    %1611 = vmatprep.subr.mxu0 0.0
    %1612 = vmatpush1.msra.mxu0 0.0
    %1613 = vmatprep.mubr.f32.mxu0 0.0
    %v1614 = vand.u32 %v1163, 4294901760
    %v1615 = vsub.f32 %v1163, %v1614
    %v1616 = vand.u32 %v1615, 4294901760
    %1617 = vmatmul.mubr.f32.gmra.mrb[0].mxu0 %v1616
    %v1618 = vpop.f32.mrb[0].mxu0
    %v1619 = vadd.f32 %v1530, %v1618
    %v1620 = vpop.f32.mrb[0].mxu0
    %1621 = vdwg.mxu0
    %1622 = vmatprep.subr.mxu0 0.0
    %v1623 = vand.u32 %v1164, 4294901760
    %v1624 = vsub.f32 %v1164, %v1623
    %v1625 = vand.u32 %v1624, 4294901760
    %1626 = vmatpush1.msra.mxu0 %v1625
    %1627 = vmatprep.subr.mxu0 0.0
    %v1628 = vand.u32 %v1165, 4294901760
    %v1629 = vsub.f32 %v1165, %v1628
    %v1630 = vand.u32 %v1629, 4294901760
    %1631 = vmatpush1.msra.mxu0 %v1630
    %1632 = vmatprep.subr.mxu0 0.0
    %v1633 = vand.u32 %v1166, 4294901760
    %v1634 = vsub.f32 %v1166, %v1633
    %v1635 = vand.u32 %v1634, 4294901760
    %1636 = vmatpush1.msra.mxu0 %v1635
    %1637 = vmatprep.subr.mxu0 0.0
    %v1638 = vand.u32 %v1167, 4294901760
    %v1639 = vsub.f32 %v1167, %v1638
    %v1640 = vand.u32 %v1639, 4294901760
    %1641 = vmatpush1.msra.mxu0 %v1640
    %1642 = vmatprep.subr.mxu0 0.0
    %v1643 = vand.u32 %v1168, 4294901760
    %v1644 = vsub.f32 %v1168, %v1643
    %v1645 = vand.u32 %v1644, 4294901760
    %1646 = vmatpush1.msra.mxu0 %v1645
    %1647 = vmatprep.subr.mxu0 0.0
    %v1648 = vand.u32 %v1169, 4294901760
    %v1649 = vsub.f32 %v1169, %v1648
    %v1650 = vand.u32 %v1649, 4294901760
    %1651 = vmatpush1.msra.mxu0 %v1650
    %1652 = vmatprep.subr.mxu0 0.0
    %v1653 = vand.u32 %v1170, 4294901760
    %v1654 = vsub.f32 %v1170, %v1653
    %v1655 = vand.u32 %v1654, 4294901760
    %1656 = vmatpush1.msra.mxu0 %v1655
    %1657 = vmatprep.subr.mxu0 0.0
    %v1658 = vand.u32 %v1171, 4294901760
    %v1659 = vsub.f32 %v1171, %v1658
    %v1660 = vand.u32 %v1659, 4294901760
    %1661 = vmatpush1.msra.mxu0 %v1660
    %1662 = vmatprep.subr.mxu0 0.0
    %v1663 = vand.u32 %v1172, 4294901760
    %v1664 = vsub.f32 %v1172, %v1663
    %v1665 = vand.u32 %v1664, 4294901760
    %1666 = vmatpush1.msra.mxu0 %v1665
    %1667 = vmatprep.subr.mxu0 0.0
    %v1668 = vand.u32 %v1173, 4294901760
    %v1669 = vsub.f32 %v1173, %v1668
    %v1670 = vand.u32 %v1669, 4294901760
    %1671 = vmatpush1.msra.mxu0 %v1670
    %1672 = vmatprep.subr.mxu0 0.0
    %v1673 = vand.u32 %v1174, 4294901760
    %v1674 = vsub.f32 %v1174, %v1673
    %v1675 = vand.u32 %v1674, 4294901760
    %1676 = vmatpush1.msra.mxu0 %v1675
    %1677 = vmatprep.subr.mxu0 0.0
    %v1678 = vand.u32 %v1175, 4294901760
    %v1679 = vsub.f32 %v1175, %v1678
    %v1680 = vand.u32 %v1679, 4294901760
    %1681 = vmatpush1.msra.mxu0 %v1680
    %1682 = vmatprep.subr.mxu0 0.0
    %v1683 = vand.u32 %v1176, 4294901760
    %v1684 = vsub.f32 %v1176, %v1683
    %v1685 = vand.u32 %v1684, 4294901760
    %1686 = vmatpush1.msra.mxu0 %v1685
    %1687 = vmatprep.subr.mxu0 0.0
    %v1688 = vand.u32 %v1177, 4294901760
    %v1689 = vsub.f32 %v1177, %v1688
    %v1690 = vand.u32 %v1689, 4294901760
    %1691 = vmatpush1.msra.mxu0 %v1690
    %1692 = vmatprep.subr.mxu0 0.0
    %v1693 = vand.u32 %v1178, 4294901760
    %v1694 = vsub.f32 %v1178, %v1693
    %v1695 = vand.u32 %v1694, 4294901760
    %1696 = vmatpush1.msra.mxu0 %v1695
    %1697 = vmatprep.subr.mxu0 0.0
    %v1698 = vand.u32 %v1179, 4294901760
    %v1699 = vsub.f32 %v1179, %v1698
    %v1700 = vand.u32 %v1699, 4294901760
    %1701 = vmatpush1.msra.mxu0 %v1700
    %1702 = vmatprep.subr.mxu0 0.0
    %1703 = vmatpush1.msra.mxu0 0.0
    %1704 = vmatprep.subr.mxu0 0.0
    %1705 = vmatpush1.msra.mxu0 0.0
    %1706 = vmatprep.subr.mxu0 0.0
    %1707 = vmatpush1.msra.mxu0 0.0
    %1708 = vmatprep.subr.mxu0 0.0
    %1709 = vmatpush1.msra.mxu0 0.0
    %1710 = vmatprep.subr.mxu0 0.0
    %1711 = vmatpush1.msra.mxu0 0.0
    %1712 = vmatprep.subr.mxu0 0.0
    %1713 = vmatpush1.msra.mxu0 0.0
    %1714 = vmatprep.subr.mxu0 0.0
    %1715 = vmatpush1.msra.mxu0 0.0
    %1716 = vmatprep.subr.mxu0 0.0
    %1717 = vmatpush1.msra.mxu0 0.0
    %1718 = vmatprep.subr.mxu0 0.0
    %1719 = vmatpush1.msra.mxu0 0.0
    %1720 = vmatprep.subr.mxu0 0.0
    %1721 = vmatpush1.msra.mxu0 0.0
    %1722 = vmatprep.subr.mxu0 0.0
    %1723 = vmatpush1.msra.mxu0 0.0
    %1724 = vmatprep.subr.mxu0 0.0
    %1725 = vmatpush1.msra.mxu0 0.0
    %1726 = vmatprep.subr.mxu0 0.0
    %1727 = vmatpush1.msra.mxu0 0.0
    %1728 = vmatprep.subr.mxu0 0.0
    %1729 = vmatpush1.msra.mxu0 0.0
    %1730 = vmatprep.subr.mxu0 0.0
    %1731 = vmatpush1.msra.mxu0 0.0
    %1732 = vmatprep.subr.mxu0 0.0
    %1733 = vmatpush1.msra.mxu0 0.0
    %1734 = vmatprep.mubr.f32.mxu0 0.0
    %v1735 = vand.u32 %v1163, 4294901760
    %1736 = vmatmul.mubr.f32.gmra.mrb[0].mxu0 %v1735
    %v1737 = vpop.f32.mrb[0].mxu0
    %v1738 = vadd.f32 %v1619, %v1737
    %v1739 = vpop.f32.mrb[0].mxu0
    %1740 = vdwg.mxu0
    %1741 = vmatprep.subr.mxu0 0.0
    %v1742 = vand.u32 %v1164, 4294901760
    %1743 = vmatpush1.msra.mxu0 %v1742
    %1744 = vmatprep.subr.mxu0 0.0
    %v1745 = vand.u32 %v1165, 4294901760
    %1746 = vmatpush1.msra.mxu0 %v1745
    %1747 = vmatprep.subr.mxu0 0.0
    %v1748 = vand.u32 %v1166, 4294901760
    %1749 = vmatpush1.msra.mxu0 %v1748
    %1750 = vmatprep.subr.mxu0 0.0
    %v1751 = vand.u32 %v1167, 4294901760
    %1752 = vmatpush1.msra.mxu0 %v1751
    %1753 = vmatprep.subr.mxu0 0.0
    %v1754 = vand.u32 %v1168, 4294901760
    %1755 = vmatpush1.msra.mxu0 %v1754
    %1756 = vmatprep.subr.mxu0 0.0
    %v1757 = vand.u32 %v1169, 4294901760
    %1758 = vmatpush1.msra.mxu0 %v1757
    %1759 = vmatprep.subr.mxu0 0.0
    %v1760 = vand.u32 %v1170, 4294901760
    %1761 = vmatpush1.msra.mxu0 %v1760
    %1762 = vmatprep.subr.mxu0 0.0
    %v1763 = vand.u32 %v1171, 4294901760
    %1764 = vmatpush1.msra.mxu0 %v1763
    %1765 = vmatprep.subr.mxu0 0.0
    %v1766 = vand.u32 %v1172, 4294901760
    %1767 = vmatpush1.msra.mxu0 %v1766
    %1768 = vmatprep.subr.mxu0 0.0
    %v1769 = vand.u32 %v1173, 4294901760
    %1770 = vmatpush1.msra.mxu0 %v1769
    %1771 = vmatprep.subr.mxu0 0.0
    %v1772 = vand.u32 %v1174, 4294901760
    %1773 = vmatpush1.msra.mxu0 %v1772
    %1774 = vmatprep.subr.mxu0 0.0
    %v1775 = vand.u32 %v1175, 4294901760
    %1776 = vmatpush1.msra.mxu0 %v1775
    %1777 = vmatprep.subr.mxu0 0.0
    %v1778 = vand.u32 %v1176, 4294901760
    %1779 = vmatpush1.msra.mxu0 %v1778
    %1780 = vmatprep.subr.mxu0 0.0
    %v1781 = vand.u32 %v1177, 4294901760
    %1782 = vmatpush1.msra.mxu0 %v1781
    %1783 = vmatprep.subr.mxu0 0.0
    %v1784 = vand.u32 %v1178, 4294901760
    %1785 = vmatpush1.msra.mxu0 %v1784
    %1786 = vmatprep.subr.mxu0 0.0
    %v1787 = vand.u32 %v1179, 4294901760
    %1788 = vmatpush1.msra.mxu0 %v1787
    %1789 = vmatprep.subr.mxu0 0.0
    %1790 = vmatpush1.msra.mxu0 0.0
    %1791 = vmatprep.subr.mxu0 0.0
    %1792 = vmatpush1.msra.mxu0 0.0
    %1793 = vmatprep.subr.mxu0 0.0
    %1794 = vmatpush1.msra.mxu0 0.0
    %1795 = vmatprep.subr.mxu0 0.0
    %1796 = vmatpush1.msra.mxu0 0.0
    %1797 = vmatprep.subr.mxu0 0.0
    %1798 = vmatpush1.msra.mxu0 0.0
    %1799 = vmatprep.subr.mxu0 0.0
    %1800 = vmatpush1.msra.mxu0 0.0
    %1801 = vmatprep.subr.mxu0 0.0
    %1802 = vmatpush1.msra.mxu0 0.0
    %1803 = vmatprep.subr.mxu0 0.0
    %1804 = vmatpush1.msra.mxu0 0.0
    %1805 = vmatprep.subr.mxu0 0.0
    %1806 = vmatpush1.msra.mxu0 0.0
    %1807 = vmatprep.subr.mxu0 0.0
    %1808 = vmatpush1.msra.mxu0 0.0
    %1809 = vmatprep.subr.mxu0 0.0
    %1810 = vmatpush1.msra.mxu0 0.0
    %1811 = vmatprep.subr.mxu0 0.0
    %1812 = vmatpush1.msra.mxu0 0.0
    %1813 = vmatprep.subr.mxu0 0.0
    %1814 = vmatpush1.msra.mxu0 0.0
    %1815 = vmatprep.subr.mxu0 0.0
    %1816 = vmatpush1.msra.mxu0 0.0
    %1817 = vmatprep.subr.mxu0 0.0
    %1818 = vmatpush1.msra.mxu0 0.0
    %1819 = vmatprep.subr.mxu0 0.0
    %1820 = vmatpush1.msra.mxu0 0.0
    %1821 = vmatprep.mubr.f32.mxu0 0.0
    %v1822 = vand.u32 %v1163, 4294901760
    %1823 = vmatmul.mubr.f32.gmra.mrb[0].mxu0 %v1822
    %v1824 = vpop.f32.mrb[0].mxu0
    %v1825 = vadd.f32 %v1738, %v1824
    %v1826 = vpop.f32.mrb[0].mxu0
    %1827 = vdwg.mxu0
    %1828 = vst.msk [vmem:[#allocation5] sm:$0xff] %vm48, %v1825
    // Predicated region
    $region34: #{tpu_custom_call.1} parent=1 // pred_check
      _
    $region35: #{tpu_custom_call.1} parent=1 // pred_check_branch
      %1830 = sbr.rel (0) target = $region37
    $region36: #{tpu_custom_call.1} parent=1 // pred_region
      %s1832 = ssub.s32 128, 128
      %1833 = vsyncadd [#allocation4], %s1832
      %s1835 = sshll.u32 [#allocation5], 4
      %s1836 = int_to_ptr.vmem [resolvable:$true] %s1835
      %1838 = dma.vmem_to_hbm [thread:$0]  %s1836, 128, %s7, [#allocation4]
    $region37: #{tpu_custom_call.1} parent=1 // pred_fallthru
      _
    // Predicated region
    $region38: #{tpu_custom_call.1} parent=1 // pred_check
      _
    $region39: #{tpu_custom_call.1} parent=1 // pred_check_branch
      %1840 = sbr.rel (0) target = $region41
    $region40: #{tpu_custom_call.1} parent=1 // pred_region
      %1841 = dma.done [#allocation4], 128
    $region41: #{tpu_custom_call.1} parent=1 // pred_fallthru
      _
    %1842 = vsyncpa [#allocation3], 1
    %1843 = vsyncpa [#allocation4], 1

</llo_original>
